<compile_context>
chip_gen: v7x
topology: tpu7x:2x2x1
jax: 0.10.0
libtpu: 0.0.40
codegen_flags: <defaults>
</compile_context>

<pallas_src>
import functools
import math

import jax
import jax.numpy as jnp
import numpy as np
from jax.experimental import pallas as pl
from jax.experimental.pallas import tpu as pltpu


# ----------------------------------------------------------------------------
# Wrapper-side (plain JAX / numpy) preprocessing helpers -- tiny, run once.
# ----------------------------------------------------------------------------
def _interp_matrix(n_in, n_out):
    """1-D linear interpolation matrix, PyTorch Upsample(align_corners=True)."""
    m = np.zeros((n_out, n_in), np.float32)
    if n_in == 1:
        m[:, 0] = 1.0
        return jnp.asarray(m)
    src = np.arange(n_out) * (n_in - 1) / (n_out - 1)
    i0 = np.clip(np.floor(src).astype(np.int64), 0, n_in - 2)
    frac = (src - i0).astype(np.float32)
    m[np.arange(n_out), i0] += 1.0 - frac
    m[np.arange(n_out), i0 + 1] += frac
    return jnp.asarray(m)


def _banded_conv_matrices(wt, W):
    """(3, 3, Cin, Cout) HWIO conv weight -> (3, W*Cin, W*Cout) banded matrices.

    M[ky][win*Cin+ci, wout*Cout+co] = wt[ky, win-wout+1, ci, co] inside the 3-tap
    band (zero elsewhere): the horizontal taps AND the W-direction zero padding
    are folded into the band structure, so a 3x3 SAME conv is 3 big matmuls.
    """
    kH, kW, _, _ = wt.shape
    mats = []
    for ky in range(kH):
        m = None
        for kx in range(kW):
            sel = jnp.eye(W, W, k=1 - kx, dtype=jnp.float32)   # win == wout+kx-1
            term = jnp.kron(sel, wt[ky, kx].astype(jnp.float32))
            m = term if m is None else m + term
        mats.append(m)
    return jnp.stack(mats, axis=0)


def _pad_channels_for_lanes(c, W, lanes=128):
    """Smallest c' >= c with (W*c') % lanes == 0 (capped at 2x to avoid blow-up)."""
    step = lanes // math.gcd(W, lanes)
    c_pad = ((c + step - 1) // step) * step
    return c_pad if c_pad <= 2 * c else c


def _pad_io(wt, cin_pad, cout_pad):
    kH, kW, ci, co = wt.shape
    return jnp.pad(wt, ((0, 0), (0, 0), (0, cin_pad - ci), (0, cout_pad - co)))


def _pad_vec(v, c_pad):
    return jnp.pad(v.astype(jnp.float32), (0, c_pad - v.shape[0]))


def _scale_shift(stats, gamma, beta, c_pad, W, count, eps):
    """(G, 2, W*c_pad) partial sum/sumsq -> per-lane BN scale/shift rows (f32)."""
    s = jnp.sum(stats.astype(jnp.float32), axis=0)             # (2, W*c_pad)
    s = s.reshape(2, W, c_pad).sum(axis=1)                      # (2, c_pad)
    mean = s[0] / count
    var = jnp.maximum(s[1] / count - mean * mean, 0.0)          # biased batch var
    scale = _pad_vec(gamma, c_pad) * jax.lax.rsqrt(var + eps)   # padded gamma = 0
    shift = _pad_vec(beta, c_pad) - mean * scale
    return jnp.tile(scale, W)[None, :], jnp.tile(shift, W)[None, :]


def _pick_batch_block(N, h, H, target_rows=256):
    """Largest divisor of N whose packed row count stays near the MXU depth."""
    nb = 1
    for d in range(1, N + 1):
        if N % d != 0 or d * H > max(target_rows, H):
            continue
        if d == N or (d * h % 8 == 0 and d * H % 8 == 0):
            nb = d
    return nb


# ----------------------------------------------------------------------------
# In-kernel helpers.
# ----------------------------------------------------------------------------
def _conv3x3_rows(a, m_ref, rows_per_image):
    """3x3 SAME conv in the lane-merged (rows, W*Cin) layout as 3 big matmuls.

    The vertical taps are cyclic row shifts + per-image boundary masks (rows are
    packed Nb images of `rows_per_image` rows each; wrapped rows always land on
    masked boundary rows, so the zero padding in H is exact).
    """
    R = a.shape[0]
    row = jax.lax.broadcasted_iota(jnp.int32, (R, 1), 0)
    top = (row % rows_per_image) == 0
    bot = (row % rows_per_image) == rows_per_image - 1
    zeros = jnp.zeros_like(a)
    a_dn = jnp.where(top, zeros, jnp.roll(a, 1, axis=0))        # a[r-1]
    a_up = jnp.where(bot, zeros, jnp.roll(a, -1, axis=0))       # a[r+1]
    acc = jnp.dot(a_dn, m_ref[0], preferred_element_type=jnp.float32)
    acc = acc + jnp.dot(a, m_ref[1], preferred_element_type=jnp.float32)
    acc = acc + jnp.dot(a_up, m_ref[2], preferred_element_type=jnp.float32)
    return acc


def _write_stats(z, s_ref):
    """Per-grid-step partial sum / sum-of-squares (f32), reduced in the wrapper."""
    s_ref[0:1, :] = jnp.sum(z, axis=0, keepdims=True)
    s_ref[1:2, :] = jnp.sum(z * z, axis=0, keepdims=True)


# ----------------------------------------------------------------------------
# Kernels.
# ----------------------------------------------------------------------------
def _up_conv_kernel(x_ref, ryb_ref, rxc_ref, m_ref, z_ref, s_ref, *, rows_per_image):
    # Bilinear upsample (align_corners=True), separable, as two big-M matmuls:
    # ryb is block-diagonal over the Nb packed images; rxc is channel-expanded.
    x = x_ref[...]
    t = jnp.dot(ryb_ref[...], x, preferred_element_type=jnp.float32)
    rxc = rxc_ref[...]
    up = jnp.dot(t.astype(rxc.dtype), rxc, preferred_element_type=jnp.float32)
    z = _conv3x3_rows(up.astype(z_ref.dtype), m_ref, rows_per_image)
    z_ref[...] = z.astype(z_ref.dtype)          # bias dropped: cancelled by BN
    _write_stats(z, s_ref)


def _cat_conv_kernel(z1_ref, sc_ref, sh_ref, pre_ref, m_ref, z_ref, s_ref,
                     *, rows_per_image):
    # Fused BN(batch stats)+ReLU of the previous conv, lane-concat with the skip
    # feature, then one 3x3 conv against the K-stacked banded weight.
    a1 = jnp.maximum(z1_ref[...].astype(jnp.float32) * sc_ref[...] + sh_ref[...], 0.0)
    pre = pre_ref[...]
    acat = jnp.concatenate([a1.astype(pre.dtype), pre], axis=-1)
    z = _conv3x3_rows(acat, m_ref, rows_per_image)
    z_ref[...] = z.astype(z_ref.dtype)
    _write_stats(z, s_ref)


def _bn_conv_kernel(zin_ref, sc_ref, sh_ref, m_ref, z_ref, s_ref, *, rows_per_image):
    a = jnp.maximum(zin_ref[...].astype(jnp.float32) * sc_ref[...] + sh_ref[...], 0.0)
    z = _conv3x3_rows(a.astype(z_ref.dtype), m_ref, rows_per_image)
    z_ref[...] = z.astype(z_ref.dtype)
    _write_stats(z, s_ref)


# ----------------------------------------------------------------------------
# pallas_call wrappers.
# ----------------------------------------------------------------------------
def _up_conv(x2d, ryb, rxc, m1, *, nb, h, H, g):
    rin, rout = nb * h, nb * H
    wcin = x2d.shape[1]
    WCin = rxc.shape[1]
    WCp = m1.shape[2]
    return pl.pallas_call(
        functools.partial(_up_conv_kernel, rows_per_image=H),
        out_shape=(jax.ShapeDtypeStruct((g * rout, WCp), x2d.dtype),
                   jax.ShapeDtypeStruct((g, 2, WCp), jnp.float32)),
        grid=(g,),
        in_specs=[
            pl.BlockSpec((rin, wcin), lambda n: (n, 0)),
            pl.BlockSpec((rout, rin), lambda n: (0, 0)),
            pl.BlockSpec((wcin, WCin), lambda n: (0, 0)),
            pl.BlockSpec((3, WCin, WCp), lambda n: (0, 0, 0)),
        ],
        out_specs=(pl.BlockSpec((rout, WCp), lambda n: (n, 0)),
                   pl.BlockSpec((None, 2, WCp), lambda n: (n, 0, 0))),
        compiler_params=pltpu.CompilerParams(dimension_semantics=("parallel",)),
    )(x2d, ryb, rxc, m1)


def _cat_conv(z1, sc, sh, pre2d, m2, *, nb, H, g):
    r = nb * H
    WCp = z1.shape[1]
    WCpre = pre2d.shape[1]
    WCout = m2.shape[2]
    return pl.pallas_call(
        functools.partial(_cat_conv_kernel, rows_per_image=H),
        out_shape=(jax.ShapeDtypeStruct((g * r, WCout), z1.dtype),
                   jax.ShapeDtypeStruct((g, 2, WCout), jnp.float32)),
        grid=(g,),
        in_specs=[
            pl.BlockSpec((r, WCp), lambda n: (n, 0)),
            pl.BlockSpec((1, WCp), lambda n: (0, 0)),
            pl.BlockSpec((1, WCp), lambda n: (0, 0)),
            pl.BlockSpec((r, WCpre), lambda n: (n, 0)),
            pl.BlockSpec((3, WCp + WCpre, WCout), lambda n: (0, 0, 0)),
        ],
        out_specs=(pl.BlockSpec((r, WCout), lambda n: (n, 0)),
                   pl.BlockSpec((None, 2, WCout), lambda n: (n, 0, 0))),
        compiler_params=pltpu.CompilerParams(dimension_semantics=("parallel",)),
    )(z1, sc, sh, pre2d, m2)


def _bn_conv(zin, sc, sh, m, *, nb, H, g):
    r = nb * H
    WCin = zin.shape[1]
    WCout = m.shape[2]
    return pl.pallas_call(
        functools.partial(_bn_conv_kernel, rows_per_image=H),
        out_shape=(jax.ShapeDtypeStruct((g * r, WCout), zin.dtype),
                   jax.ShapeDtypeStruct((g, 2, WCout), jnp.float32)),
        grid=(g,),
        in_specs=[
            pl.BlockSpec((r, WCin), lambda n: (n, 0)),
            pl.BlockSpec((1, WCin), lambda n: (0, 0)),
            pl.BlockSpec((1, WCin), lambda n: (0, 0)),
            pl.BlockSpec((3, WCin, WCout), lambda n: (0, 0, 0)),
        ],
        out_specs=(pl.BlockSpec((r, WCout), lambda n: (n, 0)),
                   pl.BlockSpec((None, 2, WCout), lambda n: (n, 0, 0))),
        compiler_params=pltpu.CompilerParams(dimension_semantics=("parallel",)),
    )(zin, sc, sh, m)


# ----------------------------------------------------------------------------
# Module-level forward: UNet_basic_up_block(pre_feature_map, x).
# ----------------------------------------------------------------------------
def unet_basic_up_block(pre_feature_map, x, params, eps=1e-5,
                        act_dtype=jnp.bfloat16):
    """NCHW in / NCHW out, training-mode BatchNorm (batch statistics)."""
    N, Cin, h, w = x.shape
    _, Cp, H, W = pre_feature_map.shape                      # H = 2h, W = 2w
    Cout = params["w2"].shape[-1]

    Cp_pad = _pad_channels_for_lanes(Cp, W)                  # lane-dense stores
    Cout_pad = _pad_channels_for_lanes(Cout, W)
    nb = _pick_batch_block(N, h, H)                          # big-M packing
    g = N // nb
    count = float(N * H * W)

    # NCHW -> lane-merged (N*H, W*C) slabs (free reshape of the NHWC layout).
    x2d = jnp.transpose(x, (0, 2, 3, 1)).reshape(N * h, w * Cin).astype(act_dtype)
    pre_nhwc = jnp.transpose(pre_feature_map, (0, 2, 3, 1))
    if Cp_pad > Cp:
        pre_nhwc = jnp.pad(pre_nhwc, ((0, 0), (0, 0), (0, 0), (0, Cp_pad - Cp)))
    pre2d = pre_nhwc.reshape(N * H, W * Cp_pad).astype(act_dtype)

    # One-time weight / interpolation preprocessing (tiny, plain JAX).
    ryb = jnp.kron(jnp.eye(nb, dtype=jnp.float32),
                   _interp_matrix(h, H)).astype(act_dtype)              # (nb*H, nb*h)
    rxc = jnp.kron(_interp_matrix(w, W).T,
                   jnp.eye(Cin, dtype=jnp.float32)).astype(act_dtype)   # (w*Cin, W*Cin)
    m1 = _banded_conv_matrices(_pad_io(params["wu"], Cin, Cp_pad),
                               W).astype(act_dtype)                     # (3, W*Cin, W*Cp')
    w1 = params["w1"]
    m2 = jnp.concatenate(                                               # K-stacked for concat
        [_banded_conv_matrices(_pad_io(w1[:, :, :Cp, :], Cp_pad, Cout_pad), W),
         _banded_conv_matrices(_pad_io(w1[:, :, Cp:, :], Cp_pad, Cout_pad), W)],
        axis=1).astype(act_dtype)                                       # (3, 2*W*Cp', W*Co')
    m3 = _banded_conv_matrices(_pad_io(params["w2"], Cout_pad, Cout_pad),
                               W).astype(act_dtype)
    # Conv biases bu/b1/b2 intentionally NOT applied: training-mode BN subtracts
    # the batch mean, which cancels any per-channel constant exactly.

    # 1) bilinear upsample + conv (Cin -> Cp), per-step partial batch stats.
    z1, s1 = _up_conv(x2d, ryb, rxc, m1, nb=nb, h=h, H=H, g=g)
    sc1, sh1 = _scale_shift(s1, params["gu"], params["beu"], Cp_pad, W, count, eps)

    # 2) BN+ReLU(z1), lane-concat skip feature, conv (2*Cp -> Cout).
    z2, s2 = _cat_conv(z1, sc1, sh1, pre2d, m2, nb=nb, H=H, g=g)
    sc2, sh2 = _scale_shift(s2, params["g1"], params["be1"], Cout_pad, W, count, eps)

    # 3) BN+ReLU(z2), conv (Cout -> Cout).
    z3, s3 = _bn_conv(z2, sc2, sh2, m3, nb=nb, H=H, g=g)
    sc3, sh3 = _scale_shift(s3, params["g2"], params["be2"], Cout_pad, W, count, eps)

    # 4) Final BN+ReLU in plain JAX: XLA fuses it with the reshape / NCHW
    #    transpose, avoiding an extra HBM pass for a purely elementwise stage.
    out = jnp.maximum(z3.astype(jnp.float32) * sc3 + sh3, 0.0)
    out = out.reshape(N, H, W, Cout_pad)[..., :Cout]
    return jnp.transpose(out, (0, 3, 1, 2))


# ----------------------------------------------------------------------------
# Pure-JAX reference (verification only) -- includes the conv biases.
# ----------------------------------------------------------------------------
def _reference(pre_nchw, x_nchw, params, eps=1e-5):
    def conv(x, w, b):                               # w: (3,3,Cin,Cout) HWIO
        w_oihw = jnp.transpose(w, (3, 2, 0, 1))
        y = jax.lax.conv_general_dilated(
            x, w_oihw, window_strides=(1, 1), padding="SAME",
            dimension_numbers=("NCHW", "OIHW", "NCHW"))
        return y + b[None, :, None, None]

    def bn_relu(y, g, be):                           # training-mode batch stats
        mean = jnp.mean(y, axis=(0, 2, 3), keepdims=True)
        var = jnp.mean((y - mean) ** 2, axis=(0, 2, 3), keepdims=True)
        out = (y - mean) * jax.lax.rsqrt(var + eps)
        out = out * g[None, :, None, None] + be[None, :, None, None]
        return jnp.maximum(out, 0.0)

    N, Cin, h, w = x_nchw.shape
    H, W = 2 * h, 2 * w
    ry = _interp_matrix(h, H)
    rx = _interp_matrix(w, W)
    up = jnp.einsum("yh,vw,nchw->ncyv", ry, rx, x_nchw)      # bilinear, align_corners
    u = bn_relu(conv(up, params["wu"], params["bu"]), params["gu"], params["beu"])
    cat = jnp.concatenate([u, pre_nchw], axis=1)
    y = bn_relu(conv(cat, params["w1"], params["b1"]), params["g1"], params["be1"])
    y = bn_relu(conv(y, params["w2"], params["b2"]), params["g2"], params["be2"])
    return y


def init_params(key, cin, cp, cout):
    ks = jax.random.split(key, 12)

    def nrm(k, shape, s=0.1):
        return s * jax.random.normal(k, shape, jnp.float32)

    return {
        # bilinear_up branch: conv (cin -> cp) + BN
        "wu": nrm(ks[0], (3, 3, cin, cp)), "bu": nrm(ks[1], (cp,)),
        "gu": 1.0 + nrm(ks[2], (cp,)), "beu": nrm(ks[3], (cp,)),
        # basic_block conv1 (2*cp -> cout) + BN
        "w1": nrm(ks[4], (3, 3, 2 * cp, cout)), "b1": nrm(ks[5], (cout,)),
        "g1": 1.0 + nrm(ks[6], (cout,)), "be1": nrm(ks[7], (cout,)),
        # basic_block conv2 (cout -> cout) + BN
        "w2": nrm(ks[8], (3, 3, cout, cout)), "b2": nrm(ks[9], (cout,)),
        "g2": 1.0 + nrm(ks[10], (cout,)), "be2": nrm(ks[11], (cout,)),
    }


if __name__ == "__main__":
    key = jax.random.PRNGKey(0)
    kx, kpre, kp = jax.random.split(key, 3)

    N, CIN, CP, COUT = 2, 8, 4, 8
    h = w = 8                                     # upsampled spatial = 16 x 16

    x = jax.random.normal(kx, (N, CIN, h, w), jnp.float32)             # low-res input
    pre = jax.random.normal(kpre, (N, CP, 2 * h, 2 * w), jnp.float32)  # skip feature
    params = init_params(kp, CIN, CP, COUT)

    fwd_f32 = jax.jit(functools.partial(unet_basic_up_block, act_dtype=jnp.float32))
    fwd_bf16 = jax.jit(functools.partial(unet_basic_up_block, act_dtype=jnp.bfloat16))

    ref = np.asarray(jax.block_until_ready(_reference(pre, x, params)))

    # f32 path: strict correctness check.
    out_f32 = np.asarray(jax.block_until_ready(fwd_f32(pre, x, params)))
    assert out_f32.shape == (N, COUT, 2 * h, 2 * w)
    np.testing.assert_allclose(out_f32, ref, rtol=2e-3, atol=2e-3)

    # bf16 fast path: sanity check (bf16 activations/weights perturb batch stats).
    out_bf16 = np.asarray(jax.block_until_ready(fwd_bf16(pre, x, params)),
                          dtype=np.float32)
    assert out_bf16.shape == (N, COUT, 2 * h, 2 * w)
    rel_l2 = np.linalg.norm(out_bf16 - ref) / (np.linalg.norm(ref) + 1e-12)
    assert rel_l2 < 0.05, f"bf16 path rel-L2 error too large: {rel_l2}"

    print("KERNEL_OK")
</pallas_src>

<mosaic_0001>
module attributes {stable_mosaic.version = 11 : i64} {
  func.func @_up_conv_kernel(%arg0: i32, %arg1: memref<16x64xf32, #tpu.memory_space<vmem>>, %arg2: memref<32x16xf32, #tpu.memory_space<vmem>>, %arg3: memref<64x128xf32, #tpu.memory_space<vmem>>, %arg4: memref<3x128x128xf32, #tpu.memory_space<vmem>>, %arg5: memref<32x128xf32, #tpu.memory_space<vmem>>, %arg6: memref<1x2x128xf32, #tpu.memory_space<vmem>>) attributes {dimension_semantics = [#tpu.dimension_semantics<parallel>], iteration_bounds = array<i64: 1>, scalar_prefetch = 0 : i64, scratch_operands = 0 : i64, tpu.core_type = #tpu.core_type<tc>, window_params = [{transform_indices = @transform_0, window_bounds = array<i64: 16, 64>}, {pipeline_mode = #tpu.pipeline_mode<synchronous>, transform_indices = @transform_1, window_bounds = array<i64: 32, 16>}, {pipeline_mode = #tpu.pipeline_mode<synchronous>, transform_indices = @transform_2, window_bounds = array<i64: 64, 128>}, {pipeline_mode = #tpu.pipeline_mode<synchronous>, transform_indices = @transform_3, window_bounds = array<i64: 3, 128, 128>}, {transform_indices = @transform_4, window_bounds = array<i64: 32, 128>}, {transform_indices = @transform_5, window_bounds = array<i64: 1, 2, 128>}]} {
    %c0 = arith.constant 0 : index
    %c0_0 = arith.constant 0 : index
    %0 = vector.load %arg1[%c0, %c0_0] : memref<16x64xf32, #tpu.memory_space<vmem>>, vector<16x64xf32>
    %c0_1 = arith.constant 0 : index
    %c0_2 = arith.constant 0 : index
    %1 = vector.load %arg2[%c0_1, %c0_2] : memref<32x16xf32, #tpu.memory_space<vmem>>, vector<32x16xf32>
    %cst = arith.constant dense<0.000000e+00> : vector<32x64xf32>
    %2 = tpu.matmul %1, %0, %cst {dimension_numbers = #tpu.dot_dimension_numbers<[1], [0], [0], [1], [0, 0, 1, 1], [], []>} : vector<32x16xf32>, vector<16x64xf32>, vector<32x64xf32> -> vector<32x64xf32>
    %c0_3 = arith.constant 0 : index
    %c0_4 = arith.constant 0 : index
    %3 = vector.load %arg3[%c0_3, %c0_4] : memref<64x128xf32, #tpu.memory_space<vmem>>, vector<64x128xf32>
    %cst_5 = arith.constant dense<0.000000e+00> : vector<32x128xf32>
    %4 = tpu.matmul %2, %3, %cst_5 {dimension_numbers = #tpu.dot_dimension_numbers<[1], [0], [0], [1], [0, 0, 1, 1], [], []>} : vector<32x64xf32>, vector<64x128xf32>, vector<32x128xf32> -> vector<32x128xf32>
    %5 = tpu.iota {dimensions = array<i32: 0>} : vector<32x1xi32>
    %c16_i32 = arith.constant 16 : i32
    %c0_i32 = arith.constant 0 : i32
    %6 = arith.cmpi eq, %c16_i32, %c0_i32 : i32
    %c1_i32 = arith.constant 1 : i32
    %7 = arith.select %6, %c1_i32, %c16_i32 : i32
    %8 = vector.broadcast %7 : i32 to vector<32x1xi32>
    %9 = arith.remsi %5, %8 : vector<32x1xi32>
    %c0_i32_6 = arith.constant 0 : i32
    %10 = vector.broadcast %c0_i32_6 : i32 to vector<32x1xi32>
    %11 = arith.cmpi ne, %9, %10 : vector<32x1xi32>
    %c0_i32_7 = arith.constant 0 : i32
    %12 = vector.broadcast %c0_i32_7 : i32 to vector<32x1xi32>
    %13 = arith.cmpi slt, %9, %12 : vector<32x1xi32>
    %c0_i32_8 = arith.constant 0 : i32
    %14 = arith.cmpi slt, %7, %c0_i32_8 : i32
    %15 = vector.broadcast %14 : i1 to vector<32x1xi1>
    %16 = vector.broadcast %15 : vector<32x1xi1> to vector<32x1xi1>
    %17 = arith.xori %13, %16 : vector<32x1xi1>
    %18 = arith.andi %17, %11 : vector<32x1xi1>
    %19 = vector.broadcast %7 : i32 to vector<32x1xi32>
    %20 = arith.addi %9, %19 : vector<32x1xi32>
    %21 = arith.select %18, %20, %9 : vector<32x1xi1>, vector<32x1xi32>
    %c0_i32_9 = arith.constant 0 : i32
    %22 = vector.broadcast %c0_i32_9 : i32 to vector<32x1xi32>
    %23 = arith.cmpi eq, %21, %22 : vector<32x1xi32>
    %c16_i32_10 = arith.constant 16 : i32
    %c0_i32_11 = arith.constant 0 : i32
    %24 = arith.cmpi eq, %c16_i32_10, %c0_i32_11 : i32
    %c1_i32_12 = arith.constant 1 : i32
    %25 = arith.select %24, %c1_i32_12, %c16_i32_10 : i32
    %26 = vector.broadcast %25 : i32 to vector<32x1xi32>
    %27 = arith.remsi %5, %26 : vector<32x1xi32>
    %c0_i32_13 = arith.constant 0 : i32
    %28 = vector.broadcast %c0_i32_13 : i32 to vector<32x1xi32>
    %29 = arith.cmpi ne, %27, %28 : vector<32x1xi32>
    %c0_i32_14 = arith.constant 0 : i32
    %30 = vector.broadcast %c0_i32_14 : i32 to vector<32x1xi32>
    %31 = arith.cmpi slt, %27, %30 : vector<32x1xi32>
    %c0_i32_15 = arith.constant 0 : i32
    %32 = arith.cmpi slt, %25, %c0_i32_15 : i32
    %33 = vector.broadcast %32 : i1 to vector<32x1xi1>
    %34 = vector.broadcast %33 : vector<32x1xi1> to vector<32x1xi1>
    %35 = arith.xori %31, %34 : vector<32x1xi1>
    %36 = arith.andi %35, %29 : vector<32x1xi1>
    %37 = vector.broadcast %25 : i32 to vector<32x1xi32>
    %38 = arith.addi %27, %37 : vector<32x1xi32>
    %39 = arith.select %36, %38, %27 : vector<32x1xi1>, vector<32x1xi32>
    %c15_i32 = arith.constant 15 : i32
    %40 = vector.broadcast %c15_i32 : i32 to vector<32x1xi32>
    %41 = arith.cmpi eq, %39, %40 : vector<32x1xi32>
    %cst_16 = arith.constant 0.000000e+00 : f32
    %42 = vector.broadcast %cst_16 : f32 to vector<32x128xf32>
    %43 = vector.extract_strided_slice %4 {offsets = [31, 0], sizes = [1, 128], strides = [1, 1]} : vector<32x128xf32> to vector<1x128xf32>
    %44 = vector.extract_strided_slice %4 {offsets = [0, 0], sizes = [31, 128], strides = [1, 1]} : vector<32x128xf32> to vector<31x128xf32>
    %45 = tpu.concatenate %43, %44 in 0 : vector<1x128xf32>, vector<31x128xf32> -> vector<32x128xf32>
    %46 = vector.shape_cast %23 : vector<32x1xi1> to vector<32x1xi1>
    %47 = vector.broadcast %46 : vector<32x1xi1> to vector<32x128xi1>
    %48 = arith.select %47, %42, %45 : vector<32x128xi1>, vector<32x128xf32>
    %49 = vector.extract_strided_slice %4 {offsets = [1, 0], sizes = [31, 128], strides = [1, 1]} : vector<32x128xf32> to vector<31x128xf32>
    %50 = vector.extract_strided_slice %4 {offsets = [0, 0], sizes = [1, 128], strides = [1, 1]} : vector<32x128xf32> to vector<1x128xf32>
    %51 = tpu.concatenate %49, %50 in 0 : vector<31x128xf32>, vector<1x128xf32> -> vector<32x128xf32>
    %52 = vector.shape_cast %41 : vector<32x1xi1> to vector<32x1xi1>
    %53 = vector.broadcast %52 : vector<32x1xi1> to vector<32x128xi1>
    %54 = arith.select %53, %42, %51 : vector<32x128xi1>, vector<32x128xf32>
    %c0_17 = arith.constant 0 : index
    %c0_18 = arith.constant 0 : index
    %c0_19 = arith.constant 0 : index
    %55 = vector.load %arg4[%c0_17, %c0_18, %c0_19] : memref<3x128x128xf32, #tpu.memory_space<vmem>>, vector<1x128x128xf32>
    %56 = vector.shape_cast %55 : vector<1x128x128xf32> to vector<128x128xf32>
    %cst_20 = arith.constant dense<0.000000e+00> : vector<32x128xf32>
    %57 = tpu.matmul %48, %56, %cst_20 {dimension_numbers = #tpu.dot_dimension_numbers<[1], [0], [0], [1], [0, 0, 1, 1], [], []>} : vector<32x128xf32>, vector<128x128xf32>, vector<32x128xf32> -> vector<32x128xf32>
    %c1 = arith.constant 1 : index
    %c0_21 = arith.constant 0 : index
    %c0_22 = arith.constant 0 : index
    %58 = vector.load %arg4[%c1, %c0_21, %c0_22] : memref<3x128x128xf32, #tpu.memory_space<vmem>>, vector<1x128x128xf32>
    %59 = vector.shape_cast %58 : vector<1x128x128xf32> to vector<128x128xf32>
    %cst_23 = arith.constant dense<0.000000e+00> : vector<32x128xf32>
    %60 = tpu.matmul %4, %59, %cst_23 {dimension_numbers = #tpu.dot_dimension_numbers<[1], [0], [0], [1], [0, 0, 1, 1], [], []>} : vector<32x128xf32>, vector<128x128xf32>, vector<32x128xf32> -> vector<32x128xf32>
    %61 = arith.addf %57, %60 : vector<32x128xf32>
    %c2 = arith.constant 2 : index
    %c0_24 = arith.constant 0 : index
    %c0_25 = arith.constant 0 : index
    %62 = vector.load %arg4[%c2, %c0_24, %c0_25] : memref<3x128x128xf32, #tpu.memory_space<vmem>>, vector<1x128x128xf32>
    %63 = vector.shape_cast %62 : vector<1x128x128xf32> to vector<128x128xf32>
    %cst_26 = arith.constant dense<0.000000e+00> : vector<32x128xf32>
    %64 = tpu.matmul %54, %63, %cst_26 {dimension_numbers = #tpu.dot_dimension_numbers<[1], [0], [0], [1], [0, 0, 1, 1], [], []>} : vector<32x128xf32>, vector<128x128xf32>, vector<32x128xf32> -> vector<32x128xf32>
    %65 = arith.addf %61, %64 : vector<32x128xf32>
    %c0_27 = arith.constant 0 : index
    %c0_28 = arith.constant 0 : index
    %66 = vector.load %arg5[%c0_27, %c0_28] : memref<32x128xf32, #tpu.memory_space<vmem>>, vector<32x128xf32>
    tpu.vector_store %arg5[%c0_27, %c0_28], %65 {strides = array<i32>} : memref<32x128xf32, #tpu.memory_space<vmem>>, vector<32x128xf32>,
    %cst_29 = arith.constant dense<0.000000e+00> : vector<128xf32>
    %67 = vector.multi_reduction <add>, %65, %cst_29 [0] : vector<32x128xf32> to vector<128xf32>
    %68 = vector.shape_cast %67 : vector<128xf32> to vector<1x128xf32>
    %c0_30 = arith.constant 0 : index
    %c0_31 = arith.constant 0 : index
    %c0_32 = arith.constant 0 : index
    %69 = vector.load %arg6[%c0_30, %c0_31, %c0_32] : memref<1x2x128xf32, #tpu.memory_space<vmem>>, vector<1x1x128xf32>
    %70 = vector.shape_cast %69 : vector<1x1x128xf32> to vector<1x128xf32>
    %71 = vector.shape_cast %68 : vector<1x128xf32> to vector<1x1x128xf32>
    tpu.vector_store %arg6[%c0_30, %c0_31, %c0_32], %71 {strides = array<i32>} : memref<1x2x128xf32, #tpu.memory_space<vmem>>, vector<1x1x128xf32>,
    %72 = arith.mulf %65, %65 : vector<32x128xf32>
    %cst_33 = arith.constant dense<0.000000e+00> : vector<128xf32>
    %73 = vector.multi_reduction <add>, %72, %cst_33 [0] : vector<32x128xf32> to vector<128xf32>
    %74 = vector.shape_cast %73 : vector<128xf32> to vector<1x128xf32>
    %c0_34 = arith.constant 0 : index
    %c1_35 = arith.constant 1 : index
    %c0_36 = arith.constant 0 : index
    %75 = vector.load %arg6[%c0_34, %c1_35, %c0_36] : memref<1x2x128xf32, #tpu.memory_space<vmem>>, vector<1x1x128xf32>
    %76 = vector.shape_cast %75 : vector<1x1x128xf32> to vector<1x128xf32>
    %77 = vector.shape_cast %74 : vector<1x128xf32> to vector<1x1x128xf32>
    tpu.vector_store %arg6[%c0_34, %c1_35, %c0_36], %77 {strides = array<i32>} : memref<1x2x128xf32, #tpu.memory_space<vmem>>, vector<1x1x128xf32>,
    return
  }
  func.func @transform_0(%arg0: i32) -> (i32, i32) {
    %c0_i32 = arith.constant 0 : i32
    %c0_i32_0 = arith.constant 0 : i32
    return %arg0, %c0_i32 : i32, i32
  }
  func.func @transform_1(%arg0: i32) -> (i32, i32) {
    %c0_i32 = arith.constant 0 : i32
    %c0_i32_0 = arith.constant 0 : i32
    %c0_i32_1 = arith.constant 0 : i32
    return %c0_i32, %c0_i32_0 : i32, i32
  }
  func.func @transform_2(%arg0: i32) -> (i32, i32) {
    %c0_i32 = arith.constant 0 : i32
    %c0_i32_0 = arith.constant 0 : i32
    %c0_i32_1 = arith.constant 0 : i32
    return %c0_i32, %c0_i32_0 : i32, i32
  }
  func.func @transform_3(%arg0: i32) -> (i32, i32, i32) {
    %c0_i32 = arith.constant 0 : i32
    %c0_i32_0 = arith.constant 0 : i32
    %c0_i32_1 = arith.constant 0 : i32
    %c0_i32_2 = arith.constant 0 : i32
    return %c0_i32, %c0_i32_0, %c0_i32_1 : i32, i32, i32
  }
  func.func @transform_4(%arg0: i32) -> (i32, i32) {
    %c0_i32 = arith.constant 0 : i32
    %c0_i32_0 = arith.constant 0 : i32
    return %arg0, %c0_i32 : i32, i32
  }
  func.func @transform_5(%arg0: i32) -> (i32, i32, i32) {
    %c0_i32 = arith.constant 0 : i32
    %c0_i32_0 = arith.constant 0 : i32
    %c0_i32_1 = arith.constant 0 : i32
    return %arg0, %c0_i32, %c0_i32_0 : i32, i32, i32
  }
}

module attributes {stable_mosaic.version = 11 : i64} {
  func.func @_cat_conv_kernel(%arg0: i32, %arg1: memref<32x128xf32, #tpu.memory_space<vmem>>, %arg2: memref<1x128xf32, #tpu.memory_space<vmem>>, %arg3: memref<1x128xf32, #tpu.memory_space<vmem>>, %arg4: memref<32x128xf32, #tpu.memory_space<vmem>>, %arg5: memref<3x256x128xf32, #tpu.memory_space<vmem>>, %arg6: memref<32x128xf32, #tpu.memory_space<vmem>>, %arg7: memref<1x2x128xf32, #tpu.memory_space<vmem>>) attributes {dimension_semantics = [#tpu.dimension_semantics<parallel>], iteration_bounds = array<i64: 1>, scalar_prefetch = 0 : i64, scratch_operands = 0 : i64, tpu.core_type = #tpu.core_type<tc>, window_params = [{transform_indices = @transform_0, window_bounds = array<i64: 32, 128>}, {pipeline_mode = #tpu.pipeline_mode<synchronous>, transform_indices = @transform_1, window_bounds = array<i64: 1, 128>}, {pipeline_mode = #tpu.pipeline_mode<synchronous>, transform_indices = @transform_2, window_bounds = array<i64: 1, 128>}, {transform_indices = @transform_3, window_bounds = array<i64: 32, 128>}, {pipeline_mode = #tpu.pipeline_mode<synchronous>, transform_indices = @transform_4, window_bounds = array<i64: 3, 256, 128>}, {transform_indices = @transform_5, window_bounds = array<i64: 32, 128>}, {transform_indices = @transform_6, window_bounds = array<i64: 1, 2, 128>}]} {
    %c0 = arith.constant 0 : index
    %c0_0 = arith.constant 0 : index
    %0 = vector.load %arg1[%c0, %c0_0] : memref<32x128xf32, #tpu.memory_space<vmem>>, vector<32x128xf32>
    %c0_1 = arith.constant 0 : index
    %c0_2 = arith.constant 0 : index
    %1 = vector.load %arg2[%c0_1, %c0_2] : memref<1x128xf32, #tpu.memory_space<vmem>>, vector<1x128xf32>
    %2 = vector.broadcast %1 : vector<1x128xf32> to vector<32x128xf32>
    %3 = arith.mulf %0, %2 : vector<32x128xf32>
    %c0_3 = arith.constant 0 : index
    %c0_4 = arith.constant 0 : index
    %4 = vector.load %arg3[%c0_3, %c0_4] : memref<1x128xf32, #tpu.memory_space<vmem>>, vector<1x128xf32>
    %5 = vector.broadcast %4 : vector<1x128xf32> to vector<32x128xf32>
    %6 = arith.addf %3, %5 : vector<32x128xf32>
    %cst = arith.constant 0.000000e+00 : f32
    %7 = vector.broadcast %cst : f32 to vector<32x128xf32>
    %8 = arith.maximumf %6, %7 : vector<32x128xf32>
    %c0_5 = arith.constant 0 : index
    %c0_6 = arith.constant 0 : index
    %9 = vector.load %arg4[%c0_5, %c0_6] : memref<32x128xf32, #tpu.memory_space<vmem>>, vector<32x128xf32>
    %10 = tpu.concatenate %8, %9 in 1 : vector<32x128xf32>, vector<32x128xf32> -> vector<32x256xf32>
    %11 = tpu.iota {dimensions = array<i32: 0>} : vector<32x1xi32>
    %c16_i32 = arith.constant 16 : i32
    %c0_i32 = arith.constant 0 : i32
    %12 = arith.cmpi eq, %c16_i32, %c0_i32 : i32
    %c1_i32 = arith.constant 1 : i32
    %13 = arith.select %12, %c1_i32, %c16_i32 : i32
    %14 = vector.broadcast %13 : i32 to vector<32x1xi32>
    %15 = arith.remsi %11, %14 : vector<32x1xi32>
    %c0_i32_7 = arith.constant 0 : i32
    %16 = vector.broadcast %c0_i32_7 : i32 to vector<32x1xi32>
    %17 = arith.cmpi ne, %15, %16 : vector<32x1xi32>
    %c0_i32_8 = arith.constant 0 : i32
    %18 = vector.broadcast %c0_i32_8 : i32 to vector<32x1xi32>
    %19 = arith.cmpi slt, %15, %18 : vector<32x1xi32>
    %c0_i32_9 = arith.constant 0 : i32
    %20 = arith.cmpi slt, %13, %c0_i32_9 : i32
    %21 = vector.broadcast %20 : i1 to vector<32x1xi1>
    %22 = vector.broadcast %21 : vector<32x1xi1> to vector<32x1xi1>
    %23 = arith.xori %19, %22 : vector<32x1xi1>
    %24 = arith.andi %23, %17 : vector<32x1xi1>
    %25 = vector.broadcast %13 : i32 to vector<32x1xi32>
    %26 = arith.addi %15, %25 : vector<32x1xi32>
    %27 = arith.select %24, %26, %15 : vector<32x1xi1>, vector<32x1xi32>
    %c0_i32_10 = arith.constant 0 : i32
    %28 = vector.broadcast %c0_i32_10 : i32 to vector<32x1xi32>
    %29 = arith.cmpi eq, %27, %28 : vector<32x1xi32>
    %c16_i32_11 = arith.constant 16 : i32
    %c0_i32_12 = arith.constant 0 : i32
    %30 = arith.cmpi eq, %c16_i32_11, %c0_i32_12 : i32
    %c1_i32_13 = arith.constant 1 : i32
    %31 = arith.select %30, %c1_i32_13, %c16_i32_11 : i32
    %32 = vector.broadcast %31 : i32 to vector<32x1xi32>
    %33 = arith.remsi %11, %32 : vector<32x1xi32>
    %c0_i32_14 = arith.constant 0 : i32
    %34 = vector.broadcast %c0_i32_14 : i32 to vector<32x1xi32>
    %35 = arith.cmpi ne, %33, %34 : vector<32x1xi32>
    %c0_i32_15 = arith.constant 0 : i32
    %36 = vector.broadcast %c0_i32_15 : i32 to vector<32x1xi32>
    %37 = arith.cmpi slt, %33, %36 : vector<32x1xi32>
    %c0_i32_16 = arith.constant 0 : i32
    %38 = arith.cmpi slt, %31, %c0_i32_16 : i32
    %39 = vector.broadcast %38 : i1 to vector<32x1xi1>
    %40 = vector.broadcast %39 : vector<32x1xi1> to vector<32x1xi1>
    %41 = arith.xori %37, %40 : vector<32x1xi1>
    %42 = arith.andi %41, %35 : vector<32x1xi1>
    %43 = vector.broadcast %31 : i32 to vector<32x1xi32>
    %44 = arith.addi %33, %43 : vector<32x1xi32>
    %45 = arith.select %42, %44, %33 : vector<32x1xi1>, vector<32x1xi32>
    %c15_i32 = arith.constant 15 : i32
    %46 = vector.broadcast %c15_i32 : i32 to vector<32x1xi32>
    %47 = arith.cmpi eq, %45, %46 : vector<32x1xi32>
    %cst_17 = arith.constant 0.000000e+00 : f32
    %48 = vector.broadcast %cst_17 : f32 to vector<32x256xf32>
    %49 = vector.extract_strided_slice %10 {offsets = [31, 0], sizes = [1, 256], strides = [1, 1]} : vector<32x256xf32> to vector<1x256xf32>
    %50 = vector.extract_strided_slice %10 {offsets = [0, 0], sizes = [31, 256], strides = [1, 1]} : vector<32x256xf32> to vector<31x256xf32>
    %51 = tpu.concatenate %49, %50 in 0 : vector<1x256xf32>, vector<31x256xf32> -> vector<32x256xf32>
    %52 = vector.shape_cast %29 : vector<32x1xi1> to vector<32x1xi1>
    %53 = vector.broadcast %52 : vector<32x1xi1> to vector<32x256xi1>
    %54 = arith.select %53, %48, %51 : vector<32x256xi1>, vector<32x256xf32>
    %55 = vector.extract_strided_slice %10 {offsets = [1, 0], sizes = [31, 256], strides = [1, 1]} : vector<32x256xf32> to vector<31x256xf32>
    %56 = vector.extract_strided_slice %10 {offsets = [0, 0], sizes = [1, 256], strides = [1, 1]} : vector<32x256xf32> to vector<1x256xf32>
    %57 = tpu.concatenate %55, %56 in 0 : vector<31x256xf32>, vector<1x256xf32> -> vector<32x256xf32>
    %58 = vector.shape_cast %47 : vector<32x1xi1> to vector<32x1xi1>
    %59 = vector.broadcast %58 : vector<32x1xi1> to vector<32x256xi1>
    %60 = arith.select %59, %48, %57 : vector<32x256xi1>, vector<32x256xf32>
    %c0_18 = arith.constant 0 : index
    %c0_19 = arith.constant 0 : index
    %c0_20 = arith.constant 0 : index
    %61 = vector.load %arg5[%c0_18, %c0_19, %c0_20] : memref<3x256x128xf32, #tpu.memory_space<vmem>>, vector<1x256x128xf32>
    %62 = vector.shape_cast %61 : vector<1x256x128xf32> to vector<256x128xf32>
    %cst_21 = arith.constant dense<0.000000e+00> : vector<32x128xf32>
    %63 = tpu.matmul %54, %62, %cst_21 {dimension_numbers = #tpu.dot_dimension_numbers<[1], [0], [0], [1], [0, 0, 1, 1], [], []>} : vector<32x256xf32>, vector<256x128xf32>, vector<32x128xf32> -> vector<32x128xf32>
    %c1 = arith.constant 1 : index
    %c0_22 = arith.constant 0 : index
    %c0_23 = arith.constant 0 : index
    %64 = vector.load %arg5[%c1, %c0_22, %c0_23] : memref<3x256x128xf32, #tpu.memory_space<vmem>>, vector<1x256x128xf32>
    %65 = vector.shape_cast %64 : vector<1x256x128xf32> to vector<256x128xf32>
    %cst_24 = arith.constant dense<0.000000e+00> : vector<32x128xf32>
    %66 = tpu.matmul %10, %65, %cst_24 {dimension_numbers = #tpu.dot_dimension_numbers<[1], [0], [0], [1], [0, 0, 1, 1], [], []>} : vector<32x256xf32>, vector<256x128xf32>, vector<32x128xf32> -> vector<32x128xf32>
    %67 = arith.addf %63, %66 : vector<32x128xf32>
    %c2 = arith.constant 2 : index
    %c0_25 = arith.constant 0 : index
    %c0_26 = arith.constant 0 : index
    %68 = vector.load %arg5[%c2, %c0_25, %c0_26] : memref<3x256x128xf32, #tpu.memory_space<vmem>>, vector<1x256x128xf32>
    %69 = vector.shape_cast %68 : vector<1x256x128xf32> to vector<256x128xf32>
    %cst_27 = arith.constant dense<0.000000e+00> : vector<32x128xf32>
    %70 = tpu.matmul %60, %69, %cst_27 {dimension_numbers = #tpu.dot_dimension_numbers<[1], [0], [0], [1], [0, 0, 1, 1], [], []>} : vector<32x256xf32>, vector<256x128xf32>, vector<32x128xf32> -> vector<32x128xf32>
    %71 = arith.addf %67, %70 : vector<32x128xf32>
    %c0_28 = arith.constant 0 : index
    %c0_29 = arith.constant 0 : index
    %72 = vector.load %arg6[%c0_28, %c0_29] : memref<32x128xf32, #tpu.memory_space<vmem>>, vector<32x128xf32>
    tpu.vector_store %arg6[%c0_28, %c0_29], %71 {strides = array<i32>} : memref<32x128xf32, #tpu.memory_space<vmem>>, vector<32x128xf32>,
    %cst_30 = arith.constant dense<0.000000e+00> : vector<128xf32>
    %73 = vector.multi_reduction <add>, %71, %cst_30 [0] : vector<32x128xf32> to vector<128xf32>
    %74 = vector.shape_cast %73 : vector<128xf32> to vector<1x128xf32>
    %c0_31 = arith.constant 0 : index
    %c0_32 = arith.constant 0 : index
    %c0_33 = arith.constant 0 : index
    %75 = vector.load %arg7[%c0_31, %c0_32, %c0_33] : memref<1x2x128xf32, #tpu.memory_space<vmem>>, vector<1x1x128xf32>
    %76 = vector.shape_cast %75 : vector<1x1x128xf32> to vector<1x128xf32>
    %77 = vector.shape_cast %74 : vector<1x128xf32> to vector<1x1x128xf32>
    tpu.vector_store %arg7[%c0_31, %c0_32, %c0_33], %77 {strides = array<i32>} : memref<1x2x128xf32, #tpu.memory_space<vmem>>, vector<1x1x128xf32>,
    %78 = arith.mulf %71, %71 : vector<32x128xf32>
    %cst_34 = arith.constant dense<0.000000e+00> : vector<128xf32>
    %79 = vector.multi_reduction <add>, %78, %cst_34 [0] : vector<32x128xf32> to vector<128xf32>
    %80 = vector.shape_cast %79 : vector<128xf32> to vector<1x128xf32>
    %c0_35 = arith.constant 0 : index
    %c1_36 = arith.constant 1 : index
    %c0_37 = arith.constant 0 : index
    %81 = vector.load %arg7[%c0_35, %c1_36, %c0_37] : memref<1x2x128xf32, #tpu.memory_space<vmem>>, vector<1x1x128xf32>
    %82 = vector.shape_cast %81 : vector<1x1x128xf32> to vector<1x128xf32>
    %83 = vector.shape_cast %80 : vector<1x128xf32> to vector<1x1x128xf32>
    tpu.vector_store %arg7[%c0_35, %c1_36, %c0_37], %83 {strides = array<i32>} : memref<1x2x128xf32, #tpu.memory_space<vmem>>, vector<1x1x128xf32>,
    return
  }
  func.func @transform_0(%arg0: i32) -> (i32, i32) {
    %c0_i32 = arith.constant 0 : i32
    %c0_i32_0 = arith.constant 0 : i32
    return %arg0, %c0_i32 : i32, i32
  }
  func.func @transform_1(%arg0: i32) -> (i32, i32) {
    %c0_i32 = arith.constant 0 : i32
    %c0_i32_0 = arith.constant 0 : i32
    %c0_i32_1 = arith.constant 0 : i32
    return %c0_i32, %c0_i32_0 : i32, i32
  }
  func.func @transform_2(%arg0: i32) -> (i32, i32) {
    %c0_i32 = arith.constant 0 : i32
    %c0_i32_0 = arith.constant 0 : i32
    %c0_i32_1 = arith.constant 0 : i32
    return %c0_i32, %c0_i32_0 : i32, i32
  }
  func.func @transform_3(%arg0: i32) -> (i32, i32) {
    %c0_i32 = arith.constant 0 : i32
    %c0_i32_0 = arith.constant 0 : i32
    return %arg0, %c0_i32 : i32, i32
  }
  func.func @transform_4(%arg0: i32) -> (i32, i32, i32) {
    %c0_i32 = arith.constant 0 : i32
    %c0_i32_0 = arith.constant 0 : i32
    %c0_i32_1 = arith.constant 0 : i32
    %c0_i32_2 = arith.constant 0 : i32
    return %c0_i32, %c0_i32_0, %c0_i32_1 : i32, i32, i32
  }
  func.func @transform_5(%arg0: i32) -> (i32, i32) {
    %c0_i32 = arith.constant 0 : i32
    %c0_i32_0 = arith.constant 0 : i32
    return %arg0, %c0_i32 : i32, i32
  }
  func.func @transform_6(%arg0: i32) -> (i32, i32, i32) {
    %c0_i32 = arith.constant 0 : i32
    %c0_i32_0 = arith.constant 0 : i32
    %c0_i32_1 = arith.constant 0 : i32
    return %arg0, %c0_i32, %c0_i32_0 : i32, i32, i32
  }
}

module attributes {stable_mosaic.version = 11 : i64} {
  func.func @_bn_conv_kernel(%arg0: i32, %arg1: memref<32x128xf32, #tpu.memory_space<vmem>>, %arg2: memref<1x128xf32, #tpu.memory_space<vmem>>, %arg3: memref<1x128xf32, #tpu.memory_space<vmem>>, %arg4: memref<3x128x128xf32, #tpu.memory_space<vmem>>, %arg5: memref<32x128xf32, #tpu.memory_space<vmem>>, %arg6: memref<1x2x128xf32, #tpu.memory_space<vmem>>) attributes {dimension_semantics = [#tpu.dimension_semantics<parallel>], iteration_bounds = array<i64: 1>, scalar_prefetch = 0 : i64, scratch_operands = 0 : i64, tpu.core_type = #tpu.core_type<tc>, window_params = [{transform_indices = @transform_0, window_bounds = array<i64: 32, 128>}, {pipeline_mode = #tpu.pipeline_mode<synchronous>, transform_indices = @transform_1, window_bounds = array<i64: 1, 128>}, {pipeline_mode = #tpu.pipeline_mode<synchronous>, transform_indices = @transform_2, window_bounds = array<i64: 1, 128>}, {pipeline_mode = #tpu.pipeline_mode<synchronous>, transform_indices = @transform_3, window_bounds = array<i64: 3, 128, 128>}, {transform_indices = @transform_4, window_bounds = array<i64: 32, 128>}, {transform_indices = @transform_5, window_bounds = array<i64: 1, 2, 128>}]} {
    %c0 = arith.constant 0 : index
    %c0_0 = arith.constant 0 : index
    %0 = vector.load %arg1[%c0, %c0_0] : memref<32x128xf32, #tpu.memory_space<vmem>>, vector<32x128xf32>
    %c0_1 = arith.constant 0 : index
    %c0_2 = arith.constant 0 : index
    %1 = vector.load %arg2[%c0_1, %c0_2] : memref<1x128xf32, #tpu.memory_space<vmem>>, vector<1x128xf32>
    %2 = vector.broadcast %1 : vector<1x128xf32> to vector<32x128xf32>
    %3 = arith.mulf %0, %2 : vector<32x128xf32>
    %c0_3 = arith.constant 0 : index
    %c0_4 = arith.constant 0 : index
    %4 = vector.load %arg3[%c0_3, %c0_4] : memref<1x128xf32, #tpu.memory_space<vmem>>, vector<1x128xf32>
    %5 = vector.broadcast %4 : vector<1x128xf32> to vector<32x128xf32>
    %6 = arith.addf %3, %5 : vector<32x128xf32>
    %cst = arith.constant 0.000000e+00 : f32
    %7 = vector.broadcast %cst : f32 to vector<32x128xf32>
    %8 = arith.maximumf %6, %7 : vector<32x128xf32>
    %9 = tpu.iota {dimensions = array<i32: 0>} : vector<32x1xi32>
    %c16_i32 = arith.constant 16 : i32
    %c0_i32 = arith.constant 0 : i32
    %10 = arith.cmpi eq, %c16_i32, %c0_i32 : i32
    %c1_i32 = arith.constant 1 : i32
    %11 = arith.select %10, %c1_i32, %c16_i32 : i32
    %12 = vector.broadcast %11 : i32 to vector<32x1xi32>
    %13 = arith.remsi %9, %12 : vector<32x1xi32>
    %c0_i32_5 = arith.constant 0 : i32
    %14 = vector.broadcast %c0_i32_5 : i32 to vector<32x1xi32>
    %15 = arith.cmpi ne, %13, %14 : vector<32x1xi32>
    %c0_i32_6 = arith.constant 0 : i32
    %16 = vector.broadcast %c0_i32_6 : i32 to vector<32x1xi32>
    %17 = arith.cmpi slt, %13, %16 : vector<32x1xi32>
    %c0_i32_7 = arith.constant 0 : i32
    %18 = arith.cmpi slt, %11, %c0_i32_7 : i32
    %19 = vector.broadcast %18 : i1 to vector<32x1xi1>
    %20 = vector.broadcast %19 : vector<32x1xi1> to vector<32x1xi1>
    %21 = arith.xori %17, %20 : vector<32x1xi1>
    %22 = arith.andi %21, %15 : vector<32x1xi1>
    %23 = vector.broadcast %11 : i32 to vector<32x1xi32>
    %24 = arith.addi %13, %23 : vector<32x1xi32>
    %25 = arith.select %22, %24, %13 : vector<32x1xi1>, vector<32x1xi32>
    %c0_i32_8 = arith.constant 0 : i32
    %26 = vector.broadcast %c0_i32_8 : i32 to vector<32x1xi32>
    %27 = arith.cmpi eq, %25, %26 : vector<32x1xi32>
    %c16_i32_9 = arith.constant 16 : i32
    %c0_i32_10 = arith.constant 0 : i32
    %28 = arith.cmpi eq, %c16_i32_9, %c0_i32_10 : i32
    %c1_i32_11 = arith.constant 1 : i32
    %29 = arith.select %28, %c1_i32_11, %c16_i32_9 : i32
    %30 = vector.broadcast %29 : i32 to vector<32x1xi32>
    %31 = arith.remsi %9, %30 : vector<32x1xi32>
    %c0_i32_12 = arith.constant 0 : i32
    %32 = vector.broadcast %c0_i32_12 : i32 to vector<32x1xi32>
    %33 = arith.cmpi ne, %31, %32 : vector<32x1xi32>
    %c0_i32_13 = arith.constant 0 : i32
    %34 = vector.broadcast %c0_i32_13 : i32 to vector<32x1xi32>
    %35 = arith.cmpi slt, %31, %34 : vector<32x1xi32>
    %c0_i32_14 = arith.constant 0 : i32
    %36 = arith.cmpi slt, %29, %c0_i32_14 : i32
    %37 = vector.broadcast %36 : i1 to vector<32x1xi1>
    %38 = vector.broadcast %37 : vector<32x1xi1> to vector<32x1xi1>
    %39 = arith.xori %35, %38 : vector<32x1xi1>
    %40 = arith.andi %39, %33 : vector<32x1xi1>
    %41 = vector.broadcast %29 : i32 to vector<32x1xi32>
    %42 = arith.addi %31, %41 : vector<32x1xi32>
    %43 = arith.select %40, %42, %31 : vector<32x1xi1>, vector<32x1xi32>
    %c15_i32 = arith.constant 15 : i32
    %44 = vector.broadcast %c15_i32 : i32 to vector<32x1xi32>
    %45 = arith.cmpi eq, %43, %44 : vector<32x1xi32>
    %cst_15 = arith.constant 0.000000e+00 : f32
    %46 = vector.broadcast %cst_15 : f32 to vector<32x128xf32>
    %47 = vector.extract_strided_slice %8 {offsets = [31, 0], sizes = [1, 128], strides = [1, 1]} : vector<32x128xf32> to vector<1x128xf32>
    %48 = vector.extract_strided_slice %8 {offsets = [0, 0], sizes = [31, 128], strides = [1, 1]} : vector<32x128xf32> to vector<31x128xf32>
    %49 = tpu.concatenate %47, %48 in 0 : vector<1x128xf32>, vector<31x128xf32> -> vector<32x128xf32>
    %50 = vector.shape_cast %27 : vector<32x1xi1> to vector<32x1xi1>
    %51 = vector.broadcast %50 : vector<32x1xi1> to vector<32x128xi1>
    %52 = arith.select %51, %46, %49 : vector<32x128xi1>, vector<32x128xf32>
    %53 = vector.extract_strided_slice %8 {offsets = [1, 0], sizes = [31, 128], strides = [1, 1]} : vector<32x128xf32> to vector<31x128xf32>
    %54 = vector.extract_strided_slice %8 {offsets = [0, 0], sizes = [1, 128], strides = [1, 1]} : vector<32x128xf32> to vector<1x128xf32>
    %55 = tpu.concatenate %53, %54 in 0 : vector<31x128xf32>, vector<1x128xf32> -> vector<32x128xf32>
    %56 = vector.shape_cast %45 : vector<32x1xi1> to vector<32x1xi1>
    %57 = vector.broadcast %56 : vector<32x1xi1> to vector<32x128xi1>
    %58 = arith.select %57, %46, %55 : vector<32x128xi1>, vector<32x128xf32>
    %c0_16 = arith.constant 0 : index
    %c0_17 = arith.constant 0 : index
    %c0_18 = arith.constant 0 : index
    %59 = vector.load %arg4[%c0_16, %c0_17, %c0_18] : memref<3x128x128xf32, #tpu.memory_space<vmem>>, vector<1x128x128xf32>
    %60 = vector.shape_cast %59 : vector<1x128x128xf32> to vector<128x128xf32>
    %cst_19 = arith.constant dense<0.000000e+00> : vector<32x128xf32>
    %61 = tpu.matmul %52, %60, %cst_19 {dimension_numbers = #tpu.dot_dimension_numbers<[1], [0], [0], [1], [0, 0, 1, 1], [], []>} : vector<32x128xf32>, vector<128x128xf32>, vector<32x128xf32> -> vector<32x128xf32>
    %c1 = arith.constant 1 : index
    %c0_20 = arith.constant 0 : index
    %c0_21 = arith.constant 0 : index
    %62 = vector.load %arg4[%c1, %c0_20, %c0_21] : memref<3x128x128xf32, #tpu.memory_space<vmem>>, vector<1x128x128xf32>
    %63 = vector.shape_cast %62 : vector<1x128x128xf32> to vector<128x128xf32>
    %cst_22 = arith.constant dense<0.000000e+00> : vector<32x128xf32>
    %64 = tpu.matmul %8, %63, %cst_22 {dimension_numbers = #tpu.dot_dimension_numbers<[1], [0], [0], [1], [0, 0, 1, 1], [], []>} : vector<32x128xf32>, vector<128x128xf32>, vector<32x128xf32> -> vector<32x128xf32>
    %65 = arith.addf %61, %64 : vector<32x128xf32>
    %c2 = arith.constant 2 : index
    %c0_23 = arith.constant 0 : index
    %c0_24 = arith.constant 0 : index
    %66 = vector.load %arg4[%c2, %c0_23, %c0_24] : memref<3x128x128xf32, #tpu.memory_space<vmem>>, vector<1x128x128xf32>
    %67 = vector.shape_cast %66 : vector<1x128x128xf32> to vector<128x128xf32>
    %cst_25 = arith.constant dense<0.000000e+00> : vector<32x128xf32>
    %68 = tpu.matmul %58, %67, %cst_25 {dimension_numbers = #tpu.dot_dimension_numbers<[1], [0], [0], [1], [0, 0, 1, 1], [], []>} : vector<32x128xf32>, vector<128x128xf32>, vector<32x128xf32> -> vector<32x128xf32>
    %69 = arith.addf %65, %68 : vector<32x128xf32>
    %c0_26 = arith.constant 0 : index
    %c0_27 = arith.constant 0 : index
    %70 = vector.load %arg5[%c0_26, %c0_27] : memref<32x128xf32, #tpu.memory_space<vmem>>, vector<32x128xf32>
    tpu.vector_store %arg5[%c0_26, %c0_27], %69 {strides = array<i32>} : memref<32x128xf32, #tpu.memory_space<vmem>>, vector<32x128xf32>,
    %cst_28 = arith.constant dense<0.000000e+00> : vector<128xf32>
    %71 = vector.multi_reduction <add>, %69, %cst_28 [0] : vector<32x128xf32> to vector<128xf32>
    %72 = vector.shape_cast %71 : vector<128xf32> to vector<1x128xf32>
    %c0_29 = arith.constant 0 : index
    %c0_30 = arith.constant 0 : index
    %c0_31 = arith.constant 0 : index
    %73 = vector.load %arg6[%c0_29, %c0_30, %c0_31] : memref<1x2x128xf32, #tpu.memory_space<vmem>>, vector<1x1x128xf32>
    %74 = vector.shape_cast %73 : vector<1x1x128xf32> to vector<1x128xf32>
    %75 = vector.shape_cast %72 : vector<1x128xf32> to vector<1x1x128xf32>
    tpu.vector_store %arg6[%c0_29, %c0_30, %c0_31], %75 {strides = array<i32>} : memref<1x2x128xf32, #tpu.memory_space<vmem>>, vector<1x1x128xf32>,
    %76 = arith.mulf %69, %69 : vector<32x128xf32>
    %cst_32 = arith.constant dense<0.000000e+00> : vector<128xf32>
    %77 = vector.multi_reduction <add>, %76, %cst_32 [0] : vector<32x128xf32> to vector<128xf32>
    %78 = vector.shape_cast %77 : vector<128xf32> to vector<1x128xf32>
    %c0_33 = arith.constant 0 : index
    %c1_34 = arith.constant 1 : index
    %c0_35 = arith.constant 0 : index
    %79 = vector.load %arg6[%c0_33, %c1_34, %c0_35] : memref<1x2x128xf32, #tpu.memory_space<vmem>>, vector<1x1x128xf32>
    %80 = vector.shape_cast %79 : vector<1x1x128xf32> to vector<1x128xf32>
    %81 = vector.shape_cast %78 : vector<1x128xf32> to vector<1x1x128xf32>
    tpu.vector_store %arg6[%c0_33, %c1_34, %c0_35], %81 {strides = array<i32>} : memref<1x2x128xf32, #tpu.memory_space<vmem>>, vector<1x1x128xf32>,
    return
  }
  func.func @transform_0(%arg0: i32) -> (i32, i32) {
    %c0_i32 = arith.constant 0 : i32
    %c0_i32_0 = arith.constant 0 : i32
    return %arg0, %c0_i32 : i32, i32
  }
  func.func @transform_1(%arg0: i32) -> (i32, i32) {
    %c0_i32 = arith.constant 0 : i32
    %c0_i32_0 = arith.constant 0 : i32
    %c0_i32_1 = arith.constant 0 : i32
    return %c0_i32, %c0_i32_0 : i32, i32
  }
  func.func @transform_2(%arg0: i32) -> (i32, i32) {
    %c0_i32 = arith.constant 0 : i32
    %c0_i32_0 = arith.constant 0 : i32
    %c0_i32_1 = arith.constant 0 : i32
    return %c0_i32, %c0_i32_0 : i32, i32
  }
  func.func @transform_3(%arg0: i32) -> (i32, i32, i32) {
    %c0_i32 = arith.constant 0 : i32
    %c0_i32_0 = arith.constant 0 : i32
    %c0_i32_1 = arith.constant 0 : i32
    %c0_i32_2 = arith.constant 0 : i32
    return %c0_i32, %c0_i32_0, %c0_i32_1 : i32, i32, i32
  }
  func.func @transform_4(%arg0: i32) -> (i32, i32) {
    %c0_i32 = arith.constant 0 : i32
    %c0_i32_0 = arith.constant 0 : i32
    return %arg0, %c0_i32 : i32, i32
  }
  func.func @transform_5(%arg0: i32) -> (i32, i32, i32) {
    %c0_i32 = arith.constant 0 : i32
    %c0_i32_0 = arith.constant 0 : i32
    %c0_i32_1 = arith.constant 0 : i32
    return %arg0, %c0_i32, %c0_i32_0 : i32, i32, i32
  }
}

</mosaic_0001>

<llo_original>
// kernel: unet_basic_up_block.3
$region0: #{unet_basic_up_block.3}
  #allocation0 [shape = 'u32[]', space=smem, size = 0x4, offset = 0x4, fixed_abs, tag = 'smem constant byte address 0x4 - core index']
  #allocation1 [shape = 'u32[144,128]{1,0:T(1,128)}', space=vmem, size = 0x12000, scoped, tag = 'internal scratch']
  %s0 = inlined_call_operand.vmem [shape: f32[16,64], index: 0, kind: input, shape index: {}]
  %s1 = inlined_call_operand.vmem [shape: f32[32,16], index: 1, kind: input, shape index: {}]
  %s2 = inlined_call_operand.vmem [shape: f32[64,128], index: 2, kind: input, shape index: {}]
  %s3 = inlined_call_operand.vmem [shape: f32[3,128,128], index: 3, kind: input, shape index: {}]
  %s4 = inlined_call_operand.vmem [shape: f32[32,128], index: 4, kind: output, shape index: {0}]
  %s5 = inlined_call_operand.vmem [shape: f32[1,2,128], index: 5, kind: output, shape index: {1}]
  %6 = xla_tuple %s4, %s5
  %s7 = sld [smem:[#allocation0]]
  $region34: #{unet_basic_up_block.3} parent=0
    _
  %s9 = ssub.s32 1, %s7
  %s10 = scalar_select 0, %s9, %s7
  // Predicated region
  $region2: #{unet_basic_up_block.3} parent=0 // pred_check
    _
  $region3: #{unet_basic_up_block.3} parent=0 // pred_check_branch
    %12 = sbr.rel (0) target = $region5
  $region4: #{unet_basic_up_block.3} parent=0 // pred_region
    _
  $region5: #{unet_basic_up_block.3} parent=0 // pred_fallthru
    _
  // Predicated region
  $region6: #{unet_basic_up_block.3} parent=0 // pred_check
    _
  $region7: #{unet_basic_up_block.3} parent=0 // pred_check_branch
    %14 = sbr.rel (0) target = $region9
  $region8: #{unet_basic_up_block.3} parent=0 // pred_region
    _
  $region9: #{unet_basic_up_block.3} parent=0 // pred_fallthru
    _
  // Predicated region
  $region10: #{unet_basic_up_block.3} parent=0 // pred_check
    _
  $region11: #{unet_basic_up_block.3} parent=0 // pred_check_branch
    %16 = sbr.rel (0) target = $region13
  $region12: #{unet_basic_up_block.3} parent=0 // pred_region
    _
  $region13: #{unet_basic_up_block.3} parent=0 // pred_fallthru
    _
  // Predicated region
  $region14: #{unet_basic_up_block.3} parent=0 // pred_check
    _
  $region15: #{unet_basic_up_block.3} parent=0 // pred_check_branch
    %18 = sbr.rel (0) target = $region17
  $region16: #{unet_basic_up_block.3} parent=0 // pred_region
    _
  $region17: #{unet_basic_up_block.3} parent=0 // pred_fallthru
    _
  %v19 = vld [vmem:[%s0] sm:$0xff]
  %v20 = vld [vmem:[%s0 + $0x8] sm:$0xff]
  %v21 = vld [vmem:[%s1] sm:$0xff]
  %v22 = vld [vmem:[%s1 + $0x8] sm:$0xff]
  %v23 = vld [vmem:[%s1 + $0x10] sm:$0xff]
  %v24 = vld [vmem:[%s1 + $0x18] sm:$0xff]
  %vm25 = vcmask 130048
  %v27 = vsel %vm25, %v21, 0
  %v30 = vsel %vm25, %v22, 0
  %v33 = vsel %vm25, %v23, 0
  %v36 = vsel %vm25, %v24, 0
  %38 = vmatprep.subr.mxu0 0.0
  %39 = vmatpush1.msra.mxu0 %v19
  %40 = vmatprep.subr.mxu0 0.0
  %41 = vmatpush1.msra.mxu0 %v20
  %42 = vmatprep.subr.mxu0 0.0
  %43 = vmatpush1.msra.mxu0 0.0
  %44 = vmatprep.subr.mxu0 0.0
  %45 = vmatpush1.msra.mxu0 0.0
  %46 = vmatprep.subr.mxu0 0.0
  %47 = vmatpush1.msra.mxu0 0.0
  %48 = vmatprep.subr.mxu0 0.0
  %49 = vmatpush1.msra.mxu0 0.0
  %50 = vmatprep.subr.mxu0 0.0
  %51 = vmatpush1.msra.mxu0 0.0
  %52 = vmatprep.subr.mxu0 0.0
  %53 = vmatpush1.msra.mxu0 0.0
  %54 = vmatprep.subr.mxu0 0.0
  %55 = vmatpush1.msra.mxu0 0.0
  %56 = vmatprep.subr.mxu0 0.0
  %57 = vmatpush1.msra.mxu0 0.0
  %58 = vmatprep.subr.mxu0 0.0
  %59 = vmatpush1.msra.mxu0 0.0
  %60 = vmatprep.subr.mxu0 0.0
  %61 = vmatpush1.msra.mxu0 0.0
  %62 = vmatprep.subr.mxu0 0.0
  %63 = vmatpush1.msra.mxu0 0.0
  %64 = vmatprep.subr.mxu0 0.0
  %65 = vmatpush1.msra.mxu0 0.0
  %66 = vmatprep.subr.mxu0 0.0
  %67 = vmatpush1.msra.mxu0 0.0
  %68 = vmatprep.subr.mxu0 0.0
  %69 = vmatpush1.msra.mxu0 0.0
  %70 = vmatprep.subr.mxu0 0.0
  %71 = vmatpush1.msra.mxu0 0.0
  %72 = vmatprep.subr.mxu0 0.0
  %73 = vmatpush1.msra.mxu0 0.0
  %74 = vmatprep.subr.mxu0 0.0
  %75 = vmatpush1.msra.mxu0 0.0
  %76 = vmatprep.subr.mxu0 0.0
  %77 = vmatpush1.msra.mxu0 0.0
  %78 = vmatprep.subr.mxu0 0.0
  %79 = vmatpush1.msra.mxu0 0.0
  %80 = vmatprep.subr.mxu0 0.0
  %81 = vmatpush1.msra.mxu0 0.0
  %82 = vmatprep.subr.mxu0 0.0
  %83 = vmatpush1.msra.mxu0 0.0
  %84 = vmatprep.subr.mxu0 0.0
  %85 = vmatpush1.msra.mxu0 0.0
  %86 = vmatprep.subr.mxu0 0.0
  %87 = vmatpush1.msra.mxu0 0.0
  %88 = vmatprep.subr.mxu0 0.0
  %89 = vmatpush1.msra.mxu0 0.0
  %90 = vmatprep.subr.mxu0 0.0
  %91 = vmatpush1.msra.mxu0 0.0
  %92 = vmatprep.subr.mxu0 0.0
  %93 = vmatpush1.msra.mxu0 0.0
  %94 = vmatprep.subr.mxu0 0.0
  %95 = vmatpush1.msra.mxu0 0.0
  %96 = vmatprep.subr.mxu0 0.0
  %97 = vmatpush1.msra.mxu0 0.0
  %98 = vmatprep.subr.mxu0 0.0
  %99 = vmatpush1.msra.mxu0 0.0
  %100 = vmatprep.subr.mxu0 0.0
  %101 = vmatpush1.msra.mxu0 0.0
  %102 = vmatprep.mubr.f32.mxu0 0.0
  %103 = vmatmul.mubr.f32.gmra.mrb[0].mxu0 %v27
  %v104 = vpop.f32.mrb[0].mxu0
  %v105 = vadd.f32 0.0, %v104
  %v106 = vpop.f32.mrb[0].mxu0
  %107 = vmatprep.mubr.f32.mxu0 0.0
  %108 = vmatmul.mubr.f32.gmra.mrb[0].mxu0 %v30
  %v109 = vpop.f32.mrb[0].mxu0
  %v110 = vadd.f32 0.0, %v109
  %v111 = vpop.f32.mrb[0].mxu0
  %112 = vmatprep.mubr.f32.mxu0 0.0
  %113 = vmatmul.mubr.f32.gmra.mrb[0].mxu0 %v33
  %v114 = vpop.f32.mrb[0].mxu0
  %v115 = vadd.f32 0.0, %v114
  %v116 = vpop.f32.mrb[0].mxu0
  %117 = vmatprep.mubr.f32.mxu0 0.0
  %118 = vmatmul.mubr.f32.gmra.mrb[0].mxu0 %v36
  %v119 = vpop.f32.mrb[0].mxu0
  %v120 = vadd.f32 0.0, %v119
  %v121 = vpop.f32.mrb[0].mxu0
  %122 = vdwg.mxu0
  %v123 = vld [vmem:[%s2] sm:$0xff]
  %v124 = vld [vmem:[%s2 + $0x8] sm:$0xff]
  %v125 = vld [vmem:[%s2 + $0x10] sm:$0xff]
  %v126 = vld [vmem:[%s2 + $0x18] sm:$0xff]
  %v127 = vld [vmem:[%s2 + $0x20] sm:$0xff]
  %v128 = vld [vmem:[%s2 + $0x28] sm:$0xff]
  %v129 = vld [vmem:[%s2 + $0x30] sm:$0xff]
  %v130 = vld [vmem:[%s2 + $0x38] sm:$0xff]
  %vm131 = vcmask 523264
  %v133 = vsel %vm131, %v105, 0
  %v136 = vsel %vm131, %v110, 0
  %v139 = vsel %vm131, %v115, 0
  %v142 = vsel %vm131, %v120, 0
  %144 = vmatprep.subr.mxu0 0.0
  %145 = vmatpush1.msra.mxu0 %v123
  %146 = vmatprep.subr.mxu0 0.0
  %147 = vmatpush1.msra.mxu0 %v124
  %148 = vmatprep.subr.mxu0 0.0
  %149 = vmatpush1.msra.mxu0 %v125
  %150 = vmatprep.subr.mxu0 0.0
  %151 = vmatpush1.msra.mxu0 %v126
  %152 = vmatprep.subr.mxu0 0.0
  %153 = vmatpush1.msra.mxu0 %v127
  %154 = vmatprep.subr.mxu0 0.0
  %155 = vmatpush1.msra.mxu0 %v128
  %156 = vmatprep.subr.mxu0 0.0
  %157 = vmatpush1.msra.mxu0 %v129
  %158 = vmatprep.subr.mxu0 0.0
  %159 = vmatpush1.msra.mxu0 %v130
  %160 = vmatprep.subr.mxu0 0.0
  %161 = vmatpush1.msra.mxu0 0.0
  %162 = vmatprep.subr.mxu0 0.0
  %163 = vmatpush1.msra.mxu0 0.0
  %164 = vmatprep.subr.mxu0 0.0
  %165 = vmatpush1.msra.mxu0 0.0
  %166 = vmatprep.subr.mxu0 0.0
  %167 = vmatpush1.msra.mxu0 0.0
  %168 = vmatprep.subr.mxu0 0.0
  %169 = vmatpush1.msra.mxu0 0.0
  %170 = vmatprep.subr.mxu0 0.0
  %171 = vmatpush1.msra.mxu0 0.0
  %172 = vmatprep.subr.mxu0 0.0
  %173 = vmatpush1.msra.mxu0 0.0
  %174 = vmatprep.subr.mxu0 0.0
  %175 = vmatpush1.msra.mxu0 0.0
  %176 = vmatprep.subr.mxu0 0.0
  %177 = vmatpush1.msra.mxu0 0.0
  %178 = vmatprep.subr.mxu0 0.0
  %179 = vmatpush1.msra.mxu0 0.0
  %180 = vmatprep.subr.mxu0 0.0
  %181 = vmatpush1.msra.mxu0 0.0
  %182 = vmatprep.subr.mxu0 0.0
  %183 = vmatpush1.msra.mxu0 0.0
  %184 = vmatprep.subr.mxu0 0.0
  %185 = vmatpush1.msra.mxu0 0.0
  %186 = vmatprep.subr.mxu0 0.0
  %187 = vmatpush1.msra.mxu0 0.0
  %188 = vmatprep.subr.mxu0 0.0
  %189 = vmatpush1.msra.mxu0 0.0
  %190 = vmatprep.subr.mxu0 0.0
  %191 = vmatpush1.msra.mxu0 0.0
  %192 = vmatprep.subr.mxu0 0.0
  %193 = vmatpush1.msra.mxu0 0.0
  %194 = vmatprep.subr.mxu0 0.0
  %195 = vmatpush1.msra.mxu0 0.0
  %196 = vmatprep.subr.mxu0 0.0
  %197 = vmatpush1.msra.mxu0 0.0
  %198 = vmatprep.subr.mxu0 0.0
  %199 = vmatpush1.msra.mxu0 0.0
  %200 = vmatprep.subr.mxu0 0.0
  %201 = vmatpush1.msra.mxu0 0.0
  %202 = vmatprep.subr.mxu0 0.0
  %203 = vmatpush1.msra.mxu0 0.0
  %204 = vmatprep.subr.mxu0 0.0
  %205 = vmatpush1.msra.mxu0 0.0
  %206 = vmatprep.subr.mxu0 0.0
  %207 = vmatpush1.msra.mxu0 0.0
  %208 = vmatprep.mubr.f32.mxu0 0.0
  %209 = vmatmul.mubr.f32.gmra.mrb[0].mxu0 %v133
  %v210 = vpop.f32.mrb[0].mxu0
  %v211 = vadd.f32 0.0, %v210
  %v212 = vpop.f32.mrb[0].mxu0
  %213 = vmatprep.mubr.f32.mxu0 0.0
  %214 = vmatmul.mubr.f32.gmra.mrb[0].mxu0 %v136
  %v215 = vpop.f32.mrb[0].mxu0
  %v216 = vadd.f32 0.0, %v215
  %v217 = vpop.f32.mrb[0].mxu0
  %218 = vmatprep.mubr.f32.mxu0 0.0
  %219 = vmatmul.mubr.f32.gmra.mrb[0].mxu0 %v139
  %v220 = vpop.f32.mrb[0].mxu0
  %v221 = vadd.f32 0.0, %v220
  %v222 = vpop.f32.mrb[0].mxu0
  %223 = vmatprep.mubr.f32.mxu0 0.0
  %224 = vmatmul.mubr.f32.gmra.mrb[0].mxu0 %v142
  %v225 = vpop.f32.mrb[0].mxu0
  %v226 = vadd.f32 0.0, %v225
  %v227 = vpop.f32.mrb[0].mxu0
  %228 = vdwg.mxu0
  %v229 = vlaneseq
  %v230 = vshrl.u32 %v229, 7
  %v231 = vadd.s32 %v230, 8
  %v232 = vadd.s32 %v230, 16
  %v233 = vadd.s32 %v230, 24
  %vm234 = vcmp.lt.s32.totalorder %v230, 0
  %v235 = vsub.s32 0, %v230
  %v236 = vsel %vm234, %v235, %v230
  %v237 = vshrl.u32 %v236, 4
  %v238 = vand.u32 %v236, 15
  %v239 = vsub.s32 0, %v238
  %v240 = vsel %vm234, %v239, %v238
  %vm241 = vcmp.lt.s32.totalorder %v231, 0
  %v242 = vsub.s32 0, %v231
  %v243 = vsel %vm241, %v242, %v231
  %v244 = vshrl.u32 %v243, 4
  %v245 = vand.u32 %v243, 15
  %v246 = vsub.s32 0, %v245
  %v247 = vsel %vm241, %v246, %v245
  %vm248 = vcmp.lt.s32.totalorder %v232, 0
  %v249 = vsub.s32 0, %v232
  %v250 = vsel %vm248, %v249, %v232
  %v251 = vshrl.u32 %v250, 4
  %v252 = vand.u32 %v250, 15
  %v253 = vsub.s32 0, %v252
  %v254 = vsel %vm248, %v253, %v252
  %vm255 = vcmp.lt.s32.totalorder %v233, 0
  %v256 = vsub.s32 0, %v233
  %v257 = vsel %vm255, %v256, %v233
  %v258 = vshrl.u32 %v257, 4
  %v259 = vand.u32 %v257, 15
  %v260 = vsub.s32 0, %v259
  %v261 = vsel %vm255, %v260, %v259
  %vm262 = vcmp.ne.s32.totalorder %v240, 0
  %vm263 = vcmp.ne.s32.totalorder %v247, 0
  %vm264 = vcmp.ne.s32.totalorder %v254, 0
  %vm265 = vcmp.ne.s32.totalorder %v261, 0
  %vm266 = vcmp.lt.s32.totalorder %v240, 0
  %vm267 = vcmp.lt.s32.totalorder %v247, 0
  %vm268 = vcmp.lt.s32.totalorder %v254, 0
  %vm269 = vcmp.lt.s32.totalorder %v261, 0
  %vm270 = vmand %vm266, %vm262
  %vm271 = vmand %vm267, %vm263
  %vm272 = vmand %vm268, %vm264
  %vm273 = vmand %vm269, %vm265
  %v274 = vadd.s32 %v240, 16
  %v275 = vadd.s32 %v247, 16
  %v276 = vadd.s32 %v254, 16
  %v277 = vadd.s32 %v261, 16
  %v278 = vsel %vm270, %v274, %v240
  %v279 = vsel %vm271, %v275, %v247
  %v280 = vsel %vm272, %v276, %v254
  %v281 = vsel %vm273, %v277, %v261
  %vm282 = vcmp.eq.s32.totalorder %v278, 0
  %vm283 = vcmp.eq.s32.totalorder %v279, 0
  %vm284 = vcmp.eq.s32.totalorder %v280, 0
  %vm285 = vcmp.eq.s32.totalorder %v281, 0
  %vm286 = vcmp.eq.s32.totalorder %v278, 15
  %vm287 = vcmp.eq.s32.totalorder %v279, 15
  %vm288 = vcmp.eq.s32.totalorder %v280, 15
  %vm289 = vcmp.eq.s32.totalorder %v281, 15
  %v291 = vrot.slane %v226, 7
  %vm296 = vcmask 1040384
  %v297 = vrot.slane %v211, 7
  %v298 = vrot.slane %v216, 7
  %v299 = vsel %vm296, %v297, %v298
  %v300 = vrot.slane %v221, 7
  %v301 = vsel %vm296, %v298, %v300
  %v302 = vsel %vm296, %v300, %v291
  %v307 = vsel %vm296, %v291, %v297
  %v308 = vsel %vm282, 1, 0
  %v309 = vsel %vm283, 1, 0
  %v310 = vsel %vm284, 1, 0
  %v311 = vsel %vm285, 1, 0
  %vm312 = vcmp.eq.s32.totalorder %v308, 1
  %vm313 = vcmp.eq.s32.totalorder %v309, 1
  %vm314 = vcmp.eq.s32.totalorder %v310, 1
  %vm315 = vcmp.eq.s32.totalorder %v311, 1
  %v316 = vsel %vm312, 0.0, %v307
  %v317 = vsel %vm313, 0.0, %v299
  %v318 = vsel %vm314, 0.0, %v301
  %v319 = vsel %vm315, 0.0, %v302
  %vm320 = vcmask 1046528
  %v321 = vrot.slane %v211, 1
  %v322 = vrot.slane %v216, 1
  %v323 = vsel %vm320, %v321, %v322
  %v324 = vrot.slane %v221, 1
  %v325 = vsel %vm320, %v322, %v324
  %v326 = vrot.slane %v226, 1
  %v327 = vsel %vm320, %v324, %v326
  %v333 = vsel %vm320, %v326, %v321
  %v334 = vsel %vm286, 1, 0
  %v335 = vsel %vm287, 1, 0
  %v336 = vsel %vm288, 1, 0
  %v337 = vsel %vm289, 1, 0
  %vm338 = vcmp.eq.s32.totalorder %v334, 1
  %vm339 = vcmp.eq.s32.totalorder %v335, 1
  %vm340 = vcmp.eq.s32.totalorder %v336, 1
  %vm341 = vcmp.eq.s32.totalorder %v337, 1
  %v342 = vsel %vm338, 0.0, %v323
  %v343 = vsel %vm339, 0.0, %v325
  %v344 = vsel %vm340, 0.0, %v327
  %v345 = vsel %vm341, 0.0, %v333
  %v346 = vld [vmem:[%s3] sm:$0xff]
  %v347 = vld [vmem:[%s3 + $0x8] sm:$0xff]
  %v348 = vld [vmem:[%s3 + $0x10] sm:$0xff]
  %v349 = vld [vmem:[%s3 + $0x18] sm:$0xff]
  %v350 = vld [vmem:[%s3 + $0x20] sm:$0xff]
  %v351 = vld [vmem:[%s3 + $0x28] sm:$0xff]
  %v352 = vld [vmem:[%s3 + $0x30] sm:$0xff]
  %v353 = vld [vmem:[%s3 + $0x38] sm:$0xff]
  %v354 = vld [vmem:[%s3 + $0x40] sm:$0xff]
  %v355 = vld [vmem:[%s3 + $0x48] sm:$0xff]
  %v356 = vld [vmem:[%s3 + $0x50] sm:$0xff]
  %v357 = vld [vmem:[%s3 + $0x58] sm:$0xff]
  %v358 = vld [vmem:[%s3 + $0x60] sm:$0xff]
  %v359 = vld [vmem:[%s3 + $0x68] sm:$0xff]
  %v360 = vld [vmem:[%s3 + $0x70] sm:$0xff]
  %v361 = vld [vmem:[%s3 + $0x78] sm:$0xff]
  %s362 = scalar_lea.vmem %s3, 128
  %v363 = vld [vmem:[%s362] sm:$0xff]
  %v364 = vld [vmem:[%s362 + $0x8] sm:$0xff]
  %v365 = vld [vmem:[%s362 + $0x10] sm:$0xff]
  %v366 = vld [vmem:[%s362 + $0x18] sm:$0xff]
  %v367 = vld [vmem:[%s362 + $0x20] sm:$0xff]
  %v368 = vld [vmem:[%s362 + $0x28] sm:$0xff]
  %v369 = vld [vmem:[%s362 + $0x30] sm:$0xff]
  %v370 = vld [vmem:[%s362 + $0x38] sm:$0xff]
  %v371 = vld [vmem:[%s362 + $0x40] sm:$0xff]
  %v372 = vld [vmem:[%s362 + $0x48] sm:$0xff]
  %v373 = vld [vmem:[%s362 + $0x50] sm:$0xff]
  %v374 = vld [vmem:[%s362 + $0x58] sm:$0xff]
  %v375 = vld [vmem:[%s362 + $0x60] sm:$0xff]
  %v376 = vld [vmem:[%s362 + $0x68] sm:$0xff]
  %v377 = vld [vmem:[%s362 + $0x70] sm:$0xff]
  %v378 = vld [vmem:[%s362 + $0x78] sm:$0xff]
  %379 = vmatprep.subr.mxu0 0.0
  %380 = vmatpush1.msra.mxu0 %v363
  %381 = vmatprep.subr.mxu0 0.0
  %382 = vmatpush1.msra.mxu0 %v364
  %383 = vmatprep.subr.mxu0 0.0
  %384 = vmatpush1.msra.mxu0 %v365
  %385 = vmatprep.subr.mxu0 0.0
  %386 = vmatpush1.msra.mxu0 %v366
  %387 = vmatprep.subr.mxu0 0.0
  %388 = vmatpush1.msra.mxu0 %v367
  %389 = vmatprep.subr.mxu0 0.0
  %390 = vmatpush1.msra.mxu0 %v368
  %391 = vmatprep.subr.mxu0 0.0
  %392 = vmatpush1.msra.mxu0 %v369
  %393 = vmatprep.subr.mxu0 0.0
  %394 = vmatpush1.msra.mxu0 %v370
  %395 = vmatprep.subr.mxu0 0.0
  %396 = vmatpush1.msra.mxu0 %v371
  %397 = vmatprep.subr.mxu0 0.0
  %398 = vmatpush1.msra.mxu0 %v372
  %399 = vmatprep.subr.mxu0 0.0
  %400 = vmatpush1.msra.mxu0 %v373
  %401 = vmatprep.subr.mxu0 0.0
  %402 = vmatpush1.msra.mxu0 %v374
  %403 = vmatprep.subr.mxu0 0.0
  %404 = vmatpush1.msra.mxu0 %v375
  %405 = vmatprep.subr.mxu0 0.0
  %406 = vmatpush1.msra.mxu0 %v376
  %407 = vmatprep.subr.mxu0 0.0
  %408 = vmatpush1.msra.mxu0 %v377
  %409 = vmatprep.subr.mxu0 0.0
  %410 = vmatpush1.msra.mxu0 %v378
  %411 = vmatprep.subr.mxu0 0.0
  %412 = vmatpush1.msra.mxu0 0.0
  %413 = vmatprep.subr.mxu0 0.0
  %414 = vmatpush1.msra.mxu0 0.0
  %415 = vmatprep.subr.mxu0 0.0
  %416 = vmatpush1.msra.mxu0 0.0
  %417 = vmatprep.subr.mxu0 0.0
  %418 = vmatpush1.msra.mxu0 0.0
  %419 = vmatprep.subr.mxu0 0.0
  %420 = vmatpush1.msra.mxu0 0.0
  %421 = vmatprep.subr.mxu0 0.0
  %422 = vmatpush1.msra.mxu0 0.0
  %423 = vmatprep.subr.mxu0 0.0
  %424 = vmatpush1.msra.mxu0 0.0
  %425 = vmatprep.subr.mxu0 0.0
  %426 = vmatpush1.msra.mxu0 0.0
  %427 = vmatprep.subr.mxu0 0.0
  %428 = vmatpush1.msra.mxu0 0.0
  %429 = vmatprep.subr.mxu0 0.0
  %430 = vmatpush1.msra.mxu0 0.0
  %431 = vmatprep.subr.mxu0 0.0
  %432 = vmatpush1.msra.mxu0 0.0
  %433 = vmatprep.subr.mxu0 0.0
  %434 = vmatpush1.msra.mxu0 0.0
  %435 = vmatprep.subr.mxu0 0.0
  %436 = vmatpush1.msra.mxu0 0.0
  %437 = vmatprep.subr.mxu0 0.0
  %438 = vmatpush1.msra.mxu0 0.0
  %439 = vmatprep.subr.mxu0 0.0
  %440 = vmatpush1.msra.mxu0 0.0
  %441 = vmatprep.subr.mxu0 0.0
  %442 = vmatpush1.msra.mxu0 0.0
  %443 = vmatprep.mubr.f32.mxu0 0.0
  %444 = vmatmul.mubr.f32.gmra.mrb[0].mxu0 %v211
  %v445 = vpop.f32.mrb[0].mxu0
  %v446 = vadd.f32 0.0, %v445
  %v447 = vpop.f32.mrb[0].mxu0
  %448 = vmatprep.mubr.f32.mxu0 0.0
  %449 = vmatmul.mubr.f32.gmra.mrb[0].mxu0 %v216
  %v450 = vpop.f32.mrb[0].mxu0
  %v451 = vadd.f32 0.0, %v450
  %v452 = vpop.f32.mrb[0].mxu0
  %453 = vmatprep.mubr.f32.mxu0 0.0
  %454 = vmatmul.mubr.f32.gmra.mrb[0].mxu0 %v221
  %v455 = vpop.f32.mrb[0].mxu0
  %v456 = vadd.f32 0.0, %v455
  %v457 = vpop.f32.mrb[0].mxu0
  %458 = vmatprep.mubr.f32.mxu0 0.0
  %459 = vmatmul.mubr.f32.gmra.mrb[0].mxu0 %v226
  %v460 = vpop.f32.mrb[0].mxu0
  %v461 = vadd.f32 0.0, %v460
  %v462 = vpop.f32.mrb[0].mxu0
  %463 = vdwg.mxu0
  %464 = vmatprep.subr.mxu0 0.0
  %465 = vmatpush1.msra.mxu0 %v346
  %466 = vmatprep.subr.mxu0 0.0
  %467 = vmatpush1.msra.mxu0 %v347
  %468 = vmatprep.subr.mxu0 0.0
  %469 = vmatpush1.msra.mxu0 %v348
  %470 = vmatprep.subr.mxu0 0.0
  %471 = vmatpush1.msra.mxu0 %v349
  %472 = vmatprep.subr.mxu0 0.0
  %473 = vmatpush1.msra.mxu0 %v350
  %474 = vmatprep.subr.mxu0 0.0
  %475 = vmatpush1.msra.mxu0 %v351
  %476 = vmatprep.subr.mxu0 0.0
  %477 = vmatpush1.msra.mxu0 %v352
  %478 = vmatprep.subr.mxu0 0.0
  %479 = vmatpush1.msra.mxu0 %v353
  %480 = vmatprep.subr.mxu0 0.0
  %481 = vmatpush1.msra.mxu0 %v354
  %482 = vmatprep.subr.mxu0 0.0
  %483 = vmatpush1.msra.mxu0 %v355
  %484 = vmatprep.subr.mxu0 0.0
  %485 = vmatpush1.msra.mxu0 %v356
  %486 = vmatprep.subr.mxu0 0.0
  %487 = vmatpush1.msra.mxu0 %v357
  %488 = vmatprep.subr.mxu0 0.0
  %489 = vmatpush1.msra.mxu0 %v358
  %490 = vmatprep.subr.mxu0 0.0
  %491 = vmatpush1.msra.mxu0 %v359
  %492 = vmatprep.subr.mxu0 0.0
  %493 = vmatpush1.msra.mxu0 %v360
  %494 = vmatprep.subr.mxu0 0.0
  %495 = vmatpush1.msra.mxu0 %v361
  %496 = vmatprep.subr.mxu0 0.0
  %497 = vmatpush1.msra.mxu0 0.0
  %498 = vmatprep.subr.mxu0 0.0
  %499 = vmatpush1.msra.mxu0 0.0
  %500 = vmatprep.subr.mxu0 0.0
  %501 = vmatpush1.msra.mxu0 0.0
  %502 = vmatprep.subr.mxu0 0.0
  %503 = vmatpush1.msra.mxu0 0.0
  %504 = vmatprep.subr.mxu0 0.0
  %505 = vmatpush1.msra.mxu0 0.0
  %506 = vmatprep.subr.mxu0 0.0
  %507 = vmatpush1.msra.mxu0 0.0
  %508 = vmatprep.subr.mxu0 0.0
  %509 = vmatpush1.msra.mxu0 0.0
  %510 = vmatprep.subr.mxu0 0.0
  %511 = vmatpush1.msra.mxu0 0.0
  %512 = vmatprep.subr.mxu0 0.0
  %513 = vmatpush1.msra.mxu0 0.0
  %514 = vmatprep.subr.mxu0 0.0
  %515 = vmatpush1.msra.mxu0 0.0
  %516 = vmatprep.subr.mxu0 0.0
  %517 = vmatpush1.msra.mxu0 0.0
  %518 = vmatprep.subr.mxu0 0.0
  %519 = vmatpush1.msra.mxu0 0.0
  %520 = vmatprep.subr.mxu0 0.0
  %521 = vmatpush1.msra.mxu0 0.0
  %522 = vmatprep.subr.mxu0 0.0
  %523 = vmatpush1.msra.mxu0 0.0
  %524 = vmatprep.subr.mxu0 0.0
  %525 = vmatpush1.msra.mxu0 0.0
  %526 = vmatprep.subr.mxu0 0.0
  %527 = vmatpush1.msra.mxu0 0.0
  %528 = vmatprep.mubr.f32.mxu0 0.0
  %529 = vmatmul.mubr.f32.gmra.mrb[0].mxu0 %v316
  %v530 = vpop.f32.mrb[0].mxu0
  %v531 = vadd.f32 %v446, %v530
  %v532 = vpop.f32.mrb[0].mxu0
  %533 = vmatprep.mubr.f32.mxu0 0.0
  %534 = vmatmul.mubr.f32.gmra.mrb[0].mxu0 %v317
  %v535 = vpop.f32.mrb[0].mxu0
  %v536 = vadd.f32 %v451, %v535
  %v537 = vpop.f32.mrb[0].mxu0
  %538 = vmatprep.mubr.f32.mxu0 0.0
  %539 = vmatmul.mubr.f32.gmra.mrb[0].mxu0 %v318
  %v540 = vpop.f32.mrb[0].mxu0
  %v541 = vadd.f32 %v456, %v540
  %v542 = vpop.f32.mrb[0].mxu0
  %543 = vmatprep.mubr.f32.mxu0 0.0
  %544 = vmatmul.mubr.f32.gmra.mrb[0].mxu0 %v319
  %v545 = vpop.f32.mrb[0].mxu0
  %v546 = vadd.f32 %v461, %v545
  %v547 = vpop.f32.mrb[0].mxu0
  %548 = vdwg.mxu0
  %s549 = scalar_lea.vmem %s3, 256
  %v550 = vld [vmem:[%s549] sm:$0xff]
  %v551 = vld [vmem:[%s549 + $0x8] sm:$0xff]
  %v552 = vld [vmem:[%s549 + $0x10] sm:$0xff]
  %v553 = vld [vmem:[%s549 + $0x18] sm:$0xff]
  %v554 = vld [vmem:[%s549 + $0x20] sm:$0xff]
  %v555 = vld [vmem:[%s549 + $0x28] sm:$0xff]
  %v556 = vld [vmem:[%s549 + $0x30] sm:$0xff]
  %v557 = vld [vmem:[%s549 + $0x38] sm:$0xff]
  %v558 = vld [vmem:[%s549 + $0x40] sm:$0xff]
  %v559 = vld [vmem:[%s549 + $0x48] sm:$0xff]
  %v560 = vld [vmem:[%s549 + $0x50] sm:$0xff]
  %v561 = vld [vmem:[%s549 + $0x58] sm:$0xff]
  %v562 = vld [vmem:[%s549 + $0x60] sm:$0xff]
  %v563 = vld [vmem:[%s549 + $0x68] sm:$0xff]
  %v564 = vld [vmem:[%s549 + $0x70] sm:$0xff]
  %v565 = vld [vmem:[%s549 + $0x78] sm:$0xff]
  %566 = vmatprep.subr.mxu0 0.0
  %567 = vmatpush1.msra.mxu0 %v550
  %568 = vmatprep.subr.mxu0 0.0
  %569 = vmatpush1.msra.mxu0 %v551
  %570 = vmatprep.subr.mxu0 0.0
  %571 = vmatpush1.msra.mxu0 %v552
  %572 = vmatprep.subr.mxu0 0.0
  %573 = vmatpush1.msra.mxu0 %v553
  %574 = vmatprep.subr.mxu0 0.0
  %575 = vmatpush1.msra.mxu0 %v554
  %576 = vmatprep.subr.mxu0 0.0
  %577 = vmatpush1.msra.mxu0 %v555
  %578 = vmatprep.subr.mxu0 0.0
  %579 = vmatpush1.msra.mxu0 %v556
  %580 = vmatprep.subr.mxu0 0.0
  %581 = vmatpush1.msra.mxu0 %v557
  %582 = vmatprep.subr.mxu0 0.0
  %583 = vmatpush1.msra.mxu0 %v558
  %584 = vmatprep.subr.mxu0 0.0
  %585 = vmatpush1.msra.mxu0 %v559
  %586 = vmatprep.subr.mxu0 0.0
  %587 = vmatpush1.msra.mxu0 %v560
  %588 = vmatprep.subr.mxu0 0.0
  %589 = vmatpush1.msra.mxu0 %v561
  %590 = vmatprep.subr.mxu0 0.0
  %591 = vmatpush1.msra.mxu0 %v562
  %592 = vmatprep.subr.mxu0 0.0
  %593 = vmatpush1.msra.mxu0 %v563
  %594 = vmatprep.subr.mxu0 0.0
  %595 = vmatpush1.msra.mxu0 %v564
  %596 = vmatprep.subr.mxu0 0.0
  %597 = vmatpush1.msra.mxu0 %v565
  %598 = vmatprep.subr.mxu0 0.0
  %599 = vmatpush1.msra.mxu0 0.0
  %600 = vmatprep.subr.mxu0 0.0
  %601 = vmatpush1.msra.mxu0 0.0
  %602 = vmatprep.subr.mxu0 0.0
  %603 = vmatpush1.msra.mxu0 0.0
  %604 = vmatprep.subr.mxu0 0.0
  %605 = vmatpush1.msra.mxu0 0.0
  %606 = vmatprep.subr.mxu0 0.0
  %607 = vmatpush1.msra.mxu0 0.0
  %608 = vmatprep.subr.mxu0 0.0
  %609 = vmatpush1.msra.mxu0 0.0
  %610 = vmatprep.subr.mxu0 0.0
  %611 = vmatpush1.msra.mxu0 0.0
  %612 = vmatprep.subr.mxu0 0.0
  %613 = vmatpush1.msra.mxu0 0.0
  %614 = vmatprep.subr.mxu0 0.0
  %615 = vmatpush1.msra.mxu0 0.0
  %616 = vmatprep.subr.mxu0 0.0
  %617 = vmatpush1.msra.mxu0 0.0
  %618 = vmatprep.subr.mxu0 0.0
  %619 = vmatpush1.msra.mxu0 0.0
  %620 = vmatprep.subr.mxu0 0.0
  %621 = vmatpush1.msra.mxu0 0.0
  %622 = vmatprep.subr.mxu0 0.0
  %623 = vmatpush1.msra.mxu0 0.0
  %624 = vmatprep.subr.mxu0 0.0
  %625 = vmatpush1.msra.mxu0 0.0
  %626 = vmatprep.subr.mxu0 0.0
  %627 = vmatpush1.msra.mxu0 0.0
  %628 = vmatprep.subr.mxu0 0.0
  %629 = vmatpush1.msra.mxu0 0.0
  %630 = vmatprep.mubr.f32.mxu0 0.0
  %631 = vmatmul.mubr.f32.gmra.mrb[0].mxu0 %v342
  %v632 = vpop.f32.mrb[0].mxu0
  %v633 = vadd.f32 0.0, %v632
  %v634 = vpop.f32.mrb[0].mxu0
  %635 = vmatprep.mubr.f32.mxu0 0.0
  %636 = vmatmul.mubr.f32.gmra.mrb[0].mxu0 %v343
  %v637 = vpop.f32.mrb[0].mxu0
  %v638 = vadd.f32 0.0, %v637
  %v639 = vpop.f32.mrb[0].mxu0
  %640 = vmatprep.mubr.f32.mxu0 0.0
  %641 = vmatmul.mubr.f32.gmra.mrb[0].mxu0 %v344
  %v642 = vpop.f32.mrb[0].mxu0
  %v643 = vadd.f32 0.0, %v642
  %v644 = vpop.f32.mrb[0].mxu0
  %645 = vmatprep.mubr.f32.mxu0 0.0
  %646 = vmatmul.mubr.f32.gmra.mrb[0].mxu0 %v345
  %v647 = vpop.f32.mrb[0].mxu0
  %v648 = vadd.f32 0.0, %v647
  %v649 = vpop.f32.mrb[0].mxu0
  %650 = vdwg.mxu0
  %v651 = vadd.f32 %v531, %v633
  %v652 = vadd.f32 %v536, %v638
  %v653 = vadd.f32 %v541, %v643
  %v654 = vadd.f32 %v546, %v648
  %655 = vst [vmem:[%s4] sm:$0xff] %v651
  %656 = vst [vmem:[%s4 + $0x8] sm:$0xff] %v652
  %657 = vst [vmem:[%s4 + $0x10] sm:$0xff] %v653
  %658 = vst [vmem:[%s4 + $0x18] sm:$0xff] %v654
  %v659 = vadd.f32 %v651, %v652
  %v660 = vadd.f32 %v659, %v653
  %v661 = vadd.f32 %v660, %v654
  %v662 = vrot.slane %v661, 4
  %v663 = vadd.f32 %v661, %v662
  %v664 = vrot.slane %v663, 2
  %v665 = vadd.f32 %v663, %v664
  %v666 = vrot.slane %v665, 1
  %v667 = vadd.f32 %v665, %v666
  %668 = vst [vmem:[%s5] sm:$0x1] %v667
  %v669 = vmul.f32 %v651, %v651
  %v670 = vmul.f32 %v652, %v652
  %v671 = vmul.f32 %v653, %v653
  %v672 = vmul.f32 %v654, %v654
  %v673 = vadd.f32 %v669, %v670
  %v674 = vadd.f32 %v673, %v671
  %v675 = vadd.f32 %v674, %v672
  %v676 = vrot.slane %v675, 4
  %v677 = vadd.f32 %v675, %v676
  %v678 = vrot.slane %v677, 2
  %v679 = vadd.f32 %v677, %v678
  %v680 = vrot.slane %v679, 1
  %v681 = vadd.f32 %v679, %v680
  %682 = vst [vmem:[%s5 + $0x1] sm:$0x1] %v681
  // Predicated region
  $region18: #{unet_basic_up_block.3} parent=0 // pred_check
    _
  $region19: #{unet_basic_up_block.3} parent=0 // pred_check_branch
    %684 = sbr.rel (0) target = $region21
  $region20: #{unet_basic_up_block.3} parent=0 // pred_region
    _
  $region21: #{unet_basic_up_block.3} parent=0 // pred_fallthru
    _
  // Predicated region
  $region22: #{unet_basic_up_block.3} parent=0 // pred_check
    _
  $region23: #{unet_basic_up_block.3} parent=0 // pred_check_branch
    %686 = sbr.rel (0) target = $region25
  $region24: #{unet_basic_up_block.3} parent=0 // pred_region
    _
  $region25: #{unet_basic_up_block.3} parent=0 // pred_fallthru
    _
  // Predicated region
  $region26: #{unet_basic_up_block.3} parent=0 // pred_check
    _
  $region27: #{unet_basic_up_block.3} parent=0 // pred_check_branch
    %688 = sbr.rel (0) target = $region29
  $region28: #{unet_basic_up_block.3} parent=0 // pred_region
    _
  $region29: #{unet_basic_up_block.3} parent=0 // pred_fallthru
    _
  // Predicated region
  $region30: #{unet_basic_up_block.3} parent=0 // pred_check
    _
  $region31: #{unet_basic_up_block.3} parent=0 // pred_check_branch
    %690 = sbr.rel (0) target = $region33
  $region32: #{unet_basic_up_block.3} parent=0 // pred_region
    _
  $region33: #{unet_basic_up_block.3} parent=0 // pred_fallthru
    _

// kernel: tile.38
$region0: #{tile.38}
  #allocation0 [shape = 's32[1]{0}', space=sflag, size = 0x4, scoped, tag = 'scoped memory for tile.38']
  %s0 = inlined_call_operand.vmem [shape: f32[8], index: 0, kind: input, shape index: {}]
  %s1 = inlined_call_operand.vmem [shape: f32[16,8], index: 1, kind: output, shape index: {}]
  // Predicated region
  $region2: #{tile.38} parent=0 // pred_check
    _
  $region3: #{tile.38} parent=0 // pred_check_branch
    %3 = sbr.rel (0) target = $region5
  $region4: #{tile.38} parent=0 // pred_region
    _
  $region5: #{tile.38} parent=0 // pred_fallthru
    _
  %v4 = vld [vmem:[%s0] ss:$0 sm:$0xff]
  %5 = vst [vmem:[%s1] sm:$0xff] %v4
  %s6 = scalar_lea.vmem %s1, 8
  %7 = vst [vmem:[%s6] sm:$0xff] %v4

// kernel: tile.39
$region0: #{tile.39}
  %s0 = inlined_call_operand.vmem [shape: f32[16,8], index: 0, kind: input, shape index: {}]
  %s1 = inlined_call_operand.vmem [shape: f32[1,128], index: 1, kind: output, shape index: {}]
  $region1: #{tile.39} parent=0
    #allocation0 [shape = 'u8[4096]{0}', space=vmem, size = 0x1000, scoped, tag = 'scoped mem for output reshape']
    %v2 = vld [vmem:[%s0] sm:$0x1]
    %vm3 = vcmask 64512
    %4 = vst.msk [vmem:[#allocation0] sm:$0x1] %vm3, %v2
    %s5 = scalar_lea.vmem %s0, 15
    %v6 = vld [vmem:[%s5] sm:$0x1]
    %7 = vrot.lane.b32.xlu0 %v6, 120
    %v8 = vpop.permute.xlu0 %7
    %vm9 = vcmask 1048512
    %10 = vst.msk [vmem:[#allocation0] sm:$0x1] %vm9, %v8
    %s11 = scalar_lea.vmem %s0, 14
    %v12 = vld [vmem:[%s11] sm:$0x1]
    %13 = vrot.lane.b32.xlu0 %v12, 112
    %v14 = vpop.permute.xlu0 %13
    %vm15 = vcmask 982912
    %16 = vst.msk [vmem:[#allocation0] sm:$0x1] %vm15, %v14
    %s17 = scalar_lea.vmem %s0, 13
    %v18 = vld [vmem:[%s17] sm:$0x1]
    %19 = vrot.lane.b32.xlu0 %v18, 104
    %v20 = vpop.permute.xlu0 %19
    %vm21 = vcmask 917312
    %22 = vst.msk [vmem:[#allocation0] sm:$0x1] %vm21, %v20
    %s23 = scalar_lea.vmem %s0, 12
    %v24 = vld [vmem:[%s23] sm:$0x1]
    %25 = vrot.lane.b32.xlu0 %v24, 96
    %v26 = vpop.permute.xlu0 %25
    %vm27 = vcmask 851712
    %28 = vst.msk [vmem:[#allocation0] sm:$0x1] %vm27, %v26
    %s29 = scalar_lea.vmem %s0, 11
    %v30 = vld [vmem:[%s29] sm:$0x1]
    %31 = vrot.lane.b32.xlu0 %v30, 88
    %v32 = vpop.permute.xlu0 %31
    %vm33 = vcmask 786112
    %34 = vst.msk [vmem:[#allocation0] sm:$0x1] %vm33, %v32
    %s35 = scalar_lea.vmem %s0, 10
    %v36 = vld [vmem:[%s35] sm:$0x1]
    %37 = vrot.lane.b32.xlu0 %v36, 80
    %v38 = vpop.permute.xlu0 %37
    %vm39 = vcmask 720512
    %40 = vst.msk [vmem:[#allocation0] sm:$0x1] %vm39, %v38
    %s41 = scalar_lea.vmem %s0, 9
    %v42 = vld [vmem:[%s41] sm:$0x1]
    %43 = vrot.lane.b32.xlu0 %v42, 72
    %v44 = vpop.permute.xlu0 %43
    %vm45 = vcmask 654912
    %46 = vst.msk [vmem:[#allocation0] sm:$0x1] %vm45, %v44
    %s47 = scalar_lea.vmem %s0, 8
    %v48 = vld [vmem:[%s47] sm:$0x1]
    %49 = vrot.lane.b32.xlu0 %v48, 64
    %v50 = vpop.permute.xlu0 %49
    %vm51 = vcmask 589312
    %52 = vst.msk [vmem:[#allocation0] sm:$0x1] %vm51, %v50
    %s53 = scalar_lea.vmem %s0, 7
    %v54 = vld [vmem:[%s53] sm:$0x1]
    %55 = vrot.lane.b32.xlu0 %v54, 56
    %v56 = vpop.permute.xlu0 %55
    %vm57 = vcmask 523712
    %58 = vst.msk [vmem:[#allocation0] sm:$0x1] %vm57, %v56
    %s59 = scalar_lea.vmem %s0, 6
    %v60 = vld [vmem:[%s59] sm:$0x1]
    %61 = vrot.lane.b32.xlu0 %v60, 48
    %v62 = vpop.permute.xlu0 %61
    %vm63 = vcmask 458112
    %64 = vst.msk [vmem:[#allocation0] sm:$0x1] %vm63, %v62
    %s65 = scalar_lea.vmem %s0, 5
    %v66 = vld [vmem:[%s65] sm:$0x1]
    %67 = vrot.lane.b32.xlu0 %v66, 40
    %v68 = vpop.permute.xlu0 %67
    %vm69 = vcmask 392512
    %70 = vst.msk [vmem:[#allocation0] sm:$0x1] %vm69, %v68
    %s71 = scalar_lea.vmem %s0, 4
    %v72 = vld [vmem:[%s71] sm:$0x1]
    %73 = vrot.lane.b32.xlu0 %v72, 32
    %v74 = vpop.permute.xlu0 %73
    %vm75 = vcmask 326912
    %76 = vst.msk [vmem:[#allocation0] sm:$0x1] %vm75, %v74
    %s77 = scalar_lea.vmem %s0, 3
    %v78 = vld [vmem:[%s77] sm:$0x1]
    %79 = vrot.lane.b32.xlu0 %v78, 24
    %v80 = vpop.permute.xlu0 %79
    %vm81 = vcmask 261312
    %82 = vst.msk [vmem:[#allocation0] sm:$0x1] %vm81, %v80
    %s83 = scalar_lea.vmem %s0, 2
    %v84 = vld [vmem:[%s83] sm:$0x1]
    %85 = vrot.lane.b32.xlu0 %v84, 16
    %v86 = vpop.permute.xlu0 %85
    %vm87 = vcmask 195712
    %88 = vst.msk [vmem:[#allocation0] sm:$0x1] %vm87, %v86
    %s89 = scalar_lea.vmem %s0, 1
    %v90 = vld [vmem:[%s89] sm:$0x1]
    %91 = vrot.lane.b32.xlu0 %v90, 8
    %v92 = vpop.permute.xlu0 %91
    %vm93 = vcmask 130112
    %94 = vst.msk [vmem:[#allocation0] sm:$0x1] %vm93, %v92
    %s96 = sshllo.u32 0, 1
    %v98 = vld [vmem:[#allocation0] sm:%s96]
    %s99 = sshllo.u32 0, 1
    %100 = vst [vmem:[%s1] sm:%s99] %v98

// kernel: unet_basic_up_block.5
$region0: #{unet_basic_up_block.5}
  #allocation0 [shape = 'u32[]', space=smem, size = 0x4, offset = 0x4, fixed_abs, tag = 'smem constant byte address 0x4 - core index']
  #allocation1 [shape = 'u32[144,128]{1,0:T(1,128)}', space=vmem, size = 0x12000, scoped, tag = 'internal scratch']
  %s0 = inlined_call_operand.vmem [shape: f32[32,128], index: 0, kind: input, shape index: {}]
  %s1 = inlined_call_operand.vmem [shape: f32[1,128], index: 1, kind: input, shape index: {}]
  %s2 = inlined_call_operand.vmem [shape: f32[1,128], index: 2, kind: input, shape index: {}]
  %s3 = inlined_call_operand.vmem [shape: f32[3,128,128], index: 3, kind: input, shape index: {}]
  %s4 = inlined_call_operand.vmem [shape: f32[32,128], index: 4, kind: output, shape index: {0}]
  %s5 = inlined_call_operand.vmem [shape: f32[1,2,128], index: 5, kind: output, shape index: {1}]
  %6 = xla_tuple %s4, %s5
  %s7 = sld [smem:[#allocation0]]
  $region34: #{unet_basic_up_block.5} parent=0
    _
  %s9 = ssub.s32 1, %s7
  %s10 = scalar_select 0, %s9, %s7
  // Predicated region
  $region2: #{unet_basic_up_block.5} parent=0 // pred_check
    _
  $region3: #{unet_basic_up_block.5} parent=0 // pred_check_branch
    %12 = sbr.rel (0) target = $region5
  $region4: #{unet_basic_up_block.5} parent=0 // pred_region
    _
  $region5: #{unet_basic_up_block.5} parent=0 // pred_fallthru
    _
  // Predicated region
  $region6: #{unet_basic_up_block.5} parent=0 // pred_check
    _
  $region7: #{unet_basic_up_block.5} parent=0 // pred_check_branch
    %14 = sbr.rel (0) target = $region9
  $region8: #{unet_basic_up_block.5} parent=0 // pred_region
    _
  $region9: #{unet_basic_up_block.5} parent=0 // pred_fallthru
    _
  // Predicated region
  $region10: #{unet_basic_up_block.5} parent=0 // pred_check
    _
  $region11: #{unet_basic_up_block.5} parent=0 // pred_check_branch
    %16 = sbr.rel (0) target = $region13
  $region12: #{unet_basic_up_block.5} parent=0 // pred_region
    _
  $region13: #{unet_basic_up_block.5} parent=0 // pred_fallthru
    _
  // Predicated region
  $region14: #{unet_basic_up_block.5} parent=0 // pred_check
    _
  $region15: #{unet_basic_up_block.5} parent=0 // pred_check_branch
    %18 = sbr.rel (0) target = $region17
  $region16: #{unet_basic_up_block.5} parent=0 // pred_region
    _
  $region17: #{unet_basic_up_block.5} parent=0 // pred_fallthru
    _
  %v19 = vld [vmem:[%s0] sm:$0xff]
  %v20 = vld [vmem:[%s0 + $0x8] sm:$0xff]
  %v21 = vld [vmem:[%s0 + $0x10] sm:$0xff]
  %v22 = vld [vmem:[%s0 + $0x18] sm:$0xff]
  %v23 = vld [vmem:[%s1] sm:$0x1]
  %v25 = vlaneseq
  %v26 = vshrl.u32 %v25, 7
  %v27 = vsub.s32 0, %v26
  %v28 = vrot.slane %v23, %v27
  %v30 = vmul.f32 %v19, %v28
  %v31 = vmul.f32 %v20, %v28
  %v32 = vmul.f32 %v21, %v28
  %v33 = vmul.f32 %v22, %v28
  %v34 = vld [vmem:[%s2] sm:$0x1]
  %v36 = vlaneseq
  %v37 = vshrl.u32 %v36, 7
  %v38 = vsub.s32 0, %v37
  %v39 = vrot.slane %v34, %v38
  %v41 = vadd.f32 %v30, %v39
  %v42 = vadd.f32 %v31, %v39
  %v43 = vadd.f32 %v32, %v39
  %v44 = vadd.f32 %v33, %v39
  %v45 = vmax.f32 %v41, 0.0
  %v46 = vmax.f32 %v42, 0.0
  %v47 = vmax.f32 %v43, 0.0
  %v48 = vmax.f32 %v44, 0.0
  %v49 = vlaneseq
  %v50 = vshrl.u32 %v49, 7
  %v51 = vadd.s32 %v50, 8
  %v52 = vadd.s32 %v50, 16
  %v53 = vadd.s32 %v50, 24
  %vm54 = vcmp.lt.s32.totalorder %v50, 0
  %v55 = vsub.s32 0, %v50
  %v56 = vsel %vm54, %v55, %v50
  %v57 = vshrl.u32 %v56, 4
  %v58 = vand.u32 %v56, 15
  %v59 = vsub.s32 0, %v58
  %v60 = vsel %vm54, %v59, %v58
  %vm61 = vcmp.lt.s32.totalorder %v51, 0
  %v62 = vsub.s32 0, %v51
  %v63 = vsel %vm61, %v62, %v51
  %v64 = vshrl.u32 %v63, 4
  %v65 = vand.u32 %v63, 15
  %v66 = vsub.s32 0, %v65
  %v67 = vsel %vm61, %v66, %v65
  %vm68 = vcmp.lt.s32.totalorder %v52, 0
  %v69 = vsub.s32 0, %v52
  %v70 = vsel %vm68, %v69, %v52
  %v71 = vshrl.u32 %v70, 4
  %v72 = vand.u32 %v70, 15
  %v73 = vsub.s32 0, %v72
  %v74 = vsel %vm68, %v73, %v72
  %vm75 = vcmp.lt.s32.totalorder %v53, 0
  %v76 = vsub.s32 0, %v53
  %v77 = vsel %vm75, %v76, %v53
  %v78 = vshrl.u32 %v77, 4
  %v79 = vand.u32 %v77, 15
  %v80 = vsub.s32 0, %v79
  %v81 = vsel %vm75, %v80, %v79
  %vm82 = vcmp.ne.s32.totalorder %v60, 0
  %vm83 = vcmp.ne.s32.totalorder %v67, 0
  %vm84 = vcmp.ne.s32.totalorder %v74, 0
  %vm85 = vcmp.ne.s32.totalorder %v81, 0
  %vm86 = vcmp.lt.s32.totalorder %v60, 0
  %vm87 = vcmp.lt.s32.totalorder %v67, 0
  %vm88 = vcmp.lt.s32.totalorder %v74, 0
  %vm89 = vcmp.lt.s32.totalorder %v81, 0
  %vm90 = vmand %vm86, %vm82
  %vm91 = vmand %vm87, %vm83
  %vm92 = vmand %vm88, %vm84
  %vm93 = vmand %vm89, %vm85
  %v94 = vadd.s32 %v60, 16
  %v95 = vadd.s32 %v67, 16
  %v96 = vadd.s32 %v74, 16
  %v97 = vadd.s32 %v81, 16
  %v98 = vsel %vm90, %v94, %v60
  %v99 = vsel %vm91, %v95, %v67
  %v100 = vsel %vm92, %v96, %v74
  %v101 = vsel %vm93, %v97, %v81
  %vm102 = vcmp.eq.s32.totalorder %v98, 0
  %vm103 = vcmp.eq.s32.totalorder %v99, 0
  %vm104 = vcmp.eq.s32.totalorder %v100, 0
  %vm105 = vcmp.eq.s32.totalorder %v101, 0
  %vm106 = vcmp.eq.s32.totalorder %v98, 15
  %vm107 = vcmp.eq.s32.totalorder %v99, 15
  %vm108 = vcmp.eq.s32.totalorder %v100, 15
  %vm109 = vcmp.eq.s32.totalorder %v101, 15
  %v111 = vrot.slane %v48, 7
  %vm116 = vcmask 1040384
  %v117 = vrot.slane %v45, 7
  %v118 = vrot.slane %v46, 7
  %v119 = vsel %vm116, %v117, %v118
  %v120 = vrot.slane %v47, 7
  %v121 = vsel %vm116, %v118, %v120
  %v122 = vsel %vm116, %v120, %v111
  %v127 = vsel %vm116, %v111, %v117
  %v128 = vsel %vm102, 1, 0
  %v129 = vsel %vm103, 1, 0
  %v130 = vsel %vm104, 1, 0
  %v131 = vsel %vm105, 1, 0
  %vm132 = vcmp.eq.s32.totalorder %v128, 1
  %vm133 = vcmp.eq.s32.totalorder %v129, 1
  %vm134 = vcmp.eq.s32.totalorder %v130, 1
  %vm135 = vcmp.eq.s32.totalorder %v131, 1
  %v136 = vsel %vm132, 0.0, %v127
  %v137 = vsel %vm133, 0.0, %v119
  %v138 = vsel %vm134, 0.0, %v121
  %v139 = vsel %vm135, 0.0, %v122
  %vm140 = vcmask 1046528
  %v141 = vrot.slane %v45, 1
  %v142 = vrot.slane %v46, 1
  %v143 = vsel %vm140, %v141, %v142
  %v144 = vrot.slane %v47, 1
  %v145 = vsel %vm140, %v142, %v144
  %v146 = vrot.slane %v48, 1
  %v147 = vsel %vm140, %v144, %v146
  %v153 = vsel %vm140, %v146, %v141
  %v154 = vsel %vm106, 1, 0
  %v155 = vsel %vm107, 1, 0
  %v156 = vsel %vm108, 1, 0
  %v157 = vsel %vm109, 1, 0
  %vm158 = vcmp.eq.s32.totalorder %v154, 1
  %vm159 = vcmp.eq.s32.totalorder %v155, 1
  %vm160 = vcmp.eq.s32.totalorder %v156, 1
  %vm161 = vcmp.eq.s32.totalorder %v157, 1
  %v162 = vsel %vm158, 0.0, %v143
  %v163 = vsel %vm159, 0.0, %v145
  %v164 = vsel %vm160, 0.0, %v147
  %v165 = vsel %vm161, 0.0, %v153
  %v166 = vld [vmem:[%s3] sm:$0xff]
  %v167 = vld [vmem:[%s3 + $0x8] sm:$0xff]
  %v168 = vld [vmem:[%s3 + $0x10] sm:$0xff]
  %v169 = vld [vmem:[%s3 + $0x18] sm:$0xff]
  %v170 = vld [vmem:[%s3 + $0x20] sm:$0xff]
  %v171 = vld [vmem:[%s3 + $0x28] sm:$0xff]
  %v172 = vld [vmem:[%s3 + $0x30] sm:$0xff]
  %v173 = vld [vmem:[%s3 + $0x38] sm:$0xff]
  %v174 = vld [vmem:[%s3 + $0x40] sm:$0xff]
  %v175 = vld [vmem:[%s3 + $0x48] sm:$0xff]
  %v176 = vld [vmem:[%s3 + $0x50] sm:$0xff]
  %v177 = vld [vmem:[%s3 + $0x58] sm:$0xff]
  %v178 = vld [vmem:[%s3 + $0x60] sm:$0xff]
  %v179 = vld [vmem:[%s3 + $0x68] sm:$0xff]
  %v180 = vld [vmem:[%s3 + $0x70] sm:$0xff]
  %v181 = vld [vmem:[%s3 + $0x78] sm:$0xff]
  %s182 = scalar_lea.vmem %s3, 128
  %v183 = vld [vmem:[%s182] sm:$0xff]
  %v184 = vld [vmem:[%s182 + $0x8] sm:$0xff]
  %v185 = vld [vmem:[%s182 + $0x10] sm:$0xff]
  %v186 = vld [vmem:[%s182 + $0x18] sm:$0xff]
  %v187 = vld [vmem:[%s182 + $0x20] sm:$0xff]
  %v188 = vld [vmem:[%s182 + $0x28] sm:$0xff]
  %v189 = vld [vmem:[%s182 + $0x30] sm:$0xff]
  %v190 = vld [vmem:[%s182 + $0x38] sm:$0xff]
  %v191 = vld [vmem:[%s182 + $0x40] sm:$0xff]
  %v192 = vld [vmem:[%s182 + $0x48] sm:$0xff]
  %v193 = vld [vmem:[%s182 + $0x50] sm:$0xff]
  %v194 = vld [vmem:[%s182 + $0x58] sm:$0xff]
  %v195 = vld [vmem:[%s182 + $0x60] sm:$0xff]
  %v196 = vld [vmem:[%s182 + $0x68] sm:$0xff]
  %v197 = vld [vmem:[%s182 + $0x70] sm:$0xff]
  %v198 = vld [vmem:[%s182 + $0x78] sm:$0xff]
  %199 = vmatprep.subr.mxu0 0.0
  %200 = vmatpush1.msra.mxu0 %v183
  %201 = vmatprep.subr.mxu0 0.0
  %202 = vmatpush1.msra.mxu0 %v184
  %203 = vmatprep.subr.mxu0 0.0
  %204 = vmatpush1.msra.mxu0 %v185
  %205 = vmatprep.subr.mxu0 0.0
  %206 = vmatpush1.msra.mxu0 %v186
  %207 = vmatprep.subr.mxu0 0.0
  %208 = vmatpush1.msra.mxu0 %v187
  %209 = vmatprep.subr.mxu0 0.0
  %210 = vmatpush1.msra.mxu0 %v188
  %211 = vmatprep.subr.mxu0 0.0
  %212 = vmatpush1.msra.mxu0 %v189
  %213 = vmatprep.subr.mxu0 0.0
  %214 = vmatpush1.msra.mxu0 %v190
  %215 = vmatprep.subr.mxu0 0.0
  %216 = vmatpush1.msra.mxu0 %v191
  %217 = vmatprep.subr.mxu0 0.0
  %218 = vmatpush1.msra.mxu0 %v192
  %219 = vmatprep.subr.mxu0 0.0
  %220 = vmatpush1.msra.mxu0 %v193
  %221 = vmatprep.subr.mxu0 0.0
  %222 = vmatpush1.msra.mxu0 %v194
  %223 = vmatprep.subr.mxu0 0.0
  %224 = vmatpush1.msra.mxu0 %v195
  %225 = vmatprep.subr.mxu0 0.0
  %226 = vmatpush1.msra.mxu0 %v196
  %227 = vmatprep.subr.mxu0 0.0
  %228 = vmatpush1.msra.mxu0 %v197
  %229 = vmatprep.subr.mxu0 0.0
  %230 = vmatpush1.msra.mxu0 %v198
  %231 = vmatprep.subr.mxu0 0.0
  %232 = vmatpush1.msra.mxu0 0.0
  %233 = vmatprep.subr.mxu0 0.0
  %234 = vmatpush1.msra.mxu0 0.0
  %235 = vmatprep.subr.mxu0 0.0
  %236 = vmatpush1.msra.mxu0 0.0
  %237 = vmatprep.subr.mxu0 0.0
  %238 = vmatpush1.msra.mxu0 0.0
  %239 = vmatprep.subr.mxu0 0.0
  %240 = vmatpush1.msra.mxu0 0.0
  %241 = vmatprep.subr.mxu0 0.0
  %242 = vmatpush1.msra.mxu0 0.0
  %243 = vmatprep.subr.mxu0 0.0
  %244 = vmatpush1.msra.mxu0 0.0
  %245 = vmatprep.subr.mxu0 0.0
  %246 = vmatpush1.msra.mxu0 0.0
  %247 = vmatprep.subr.mxu0 0.0
  %248 = vmatpush1.msra.mxu0 0.0
  %249 = vmatprep.subr.mxu0 0.0
  %250 = vmatpush1.msra.mxu0 0.0
  %251 = vmatprep.subr.mxu0 0.0
  %252 = vmatpush1.msra.mxu0 0.0
  %253 = vmatprep.subr.mxu0 0.0
  %254 = vmatpush1.msra.mxu0 0.0
  %255 = vmatprep.subr.mxu0 0.0
  %256 = vmatpush1.msra.mxu0 0.0
  %257 = vmatprep.subr.mxu0 0.0
  %258 = vmatpush1.msra.mxu0 0.0
  %259 = vmatprep.subr.mxu0 0.0
  %260 = vmatpush1.msra.mxu0 0.0
  %261 = vmatprep.subr.mxu0 0.0
  %262 = vmatpush1.msra.mxu0 0.0
  %263 = vmatprep.mubr.f32.mxu0 0.0
  %264 = vmatmul.mubr.f32.gmra.mrb[0].mxu0 %v45
  %v265 = vpop.f32.mrb[0].mxu0
  %v266 = vadd.f32 0.0, %v265
  %v267 = vpop.f32.mrb[0].mxu0
  %268 = vmatprep.mubr.f32.mxu0 0.0
  %269 = vmatmul.mubr.f32.gmra.mrb[0].mxu0 %v46
  %v270 = vpop.f32.mrb[0].mxu0
  %v271 = vadd.f32 0.0, %v270
  %v272 = vpop.f32.mrb[0].mxu0
  %273 = vmatprep.mubr.f32.mxu0 0.0
  %274 = vmatmul.mubr.f32.gmra.mrb[0].mxu0 %v47
  %v275 = vpop.f32.mrb[0].mxu0
  %v276 = vadd.f32 0.0, %v275
  %v277 = vpop.f32.mrb[0].mxu0
  %278 = vmatprep.mubr.f32.mxu0 0.0
  %279 = vmatmul.mubr.f32.gmra.mrb[0].mxu0 %v48
  %v280 = vpop.f32.mrb[0].mxu0
  %v281 = vadd.f32 0.0, %v280
  %v282 = vpop.f32.mrb[0].mxu0
  %283 = vdwg.mxu0
  %284 = vmatprep.subr.mxu0 0.0
  %285 = vmatpush1.msra.mxu0 %v166
  %286 = vmatprep.subr.mxu0 0.0
  %287 = vmatpush1.msra.mxu0 %v167
  %288 = vmatprep.subr.mxu0 0.0
  %289 = vmatpush1.msra.mxu0 %v168
  %290 = vmatprep.subr.mxu0 0.0
  %291 = vmatpush1.msra.mxu0 %v169
  %292 = vmatprep.subr.mxu0 0.0
  %293 = vmatpush1.msra.mxu0 %v170
  %294 = vmatprep.subr.mxu0 0.0
  %295 = vmatpush1.msra.mxu0 %v171
  %296 = vmatprep.subr.mxu0 0.0
  %297 = vmatpush1.msra.mxu0 %v172
  %298 = vmatprep.subr.mxu0 0.0
  %299 = vmatpush1.msra.mxu0 %v173
  %300 = vmatprep.subr.mxu0 0.0
  %301 = vmatpush1.msra.mxu0 %v174
  %302 = vmatprep.subr.mxu0 0.0
  %303 = vmatpush1.msra.mxu0 %v175
  %304 = vmatprep.subr.mxu0 0.0
  %305 = vmatpush1.msra.mxu0 %v176
  %306 = vmatprep.subr.mxu0 0.0
  %307 = vmatpush1.msra.mxu0 %v177
  %308 = vmatprep.subr.mxu0 0.0
  %309 = vmatpush1.msra.mxu0 %v178
  %310 = vmatprep.subr.mxu0 0.0
  %311 = vmatpush1.msra.mxu0 %v179
  %312 = vmatprep.subr.mxu0 0.0
  %313 = vmatpush1.msra.mxu0 %v180
  %314 = vmatprep.subr.mxu0 0.0
  %315 = vmatpush1.msra.mxu0 %v181
  %316 = vmatprep.subr.mxu0 0.0
  %317 = vmatpush1.msra.mxu0 0.0
  %318 = vmatprep.subr.mxu0 0.0
  %319 = vmatpush1.msra.mxu0 0.0
  %320 = vmatprep.subr.mxu0 0.0
  %321 = vmatpush1.msra.mxu0 0.0
  %322 = vmatprep.subr.mxu0 0.0
  %323 = vmatpush1.msra.mxu0 0.0
  %324 = vmatprep.subr.mxu0 0.0
  %325 = vmatpush1.msra.mxu0 0.0
  %326 = vmatprep.subr.mxu0 0.0
  %327 = vmatpush1.msra.mxu0 0.0
  %328 = vmatprep.subr.mxu0 0.0
  %329 = vmatpush1.msra.mxu0 0.0
  %330 = vmatprep.subr.mxu0 0.0
  %331 = vmatpush1.msra.mxu0 0.0
  %332 = vmatprep.subr.mxu0 0.0
  %333 = vmatpush1.msra.mxu0 0.0
  %334 = vmatprep.subr.mxu0 0.0
  %335 = vmatpush1.msra.mxu0 0.0
  %336 = vmatprep.subr.mxu0 0.0
  %337 = vmatpush1.msra.mxu0 0.0
  %338 = vmatprep.subr.mxu0 0.0
  %339 = vmatpush1.msra.mxu0 0.0
  %340 = vmatprep.subr.mxu0 0.0
  %341 = vmatpush1.msra.mxu0 0.0
  %342 = vmatprep.subr.mxu0 0.0
  %343 = vmatpush1.msra.mxu0 0.0
  %344 = vmatprep.subr.mxu0 0.0
  %345 = vmatpush1.msra.mxu0 0.0
  %346 = vmatprep.subr.mxu0 0.0
  %347 = vmatpush1.msra.mxu0 0.0
  %348 = vmatprep.mubr.f32.mxu0 0.0
  %349 = vmatmul.mubr.f32.gmra.mrb[0].mxu0 %v136
  %v350 = vpop.f32.mrb[0].mxu0
  %v351 = vadd.f32 %v266, %v350
  %v352 = vpop.f32.mrb[0].mxu0
  %353 = vmatprep.mubr.f32.mxu0 0.0
  %354 = vmatmul.mubr.f32.gmra.mrb[0].mxu0 %v137
  %v355 = vpop.f32.mrb[0].mxu0
  %v356 = vadd.f32 %v271, %v355
  %v357 = vpop.f32.mrb[0].mxu0
  %358 = vmatprep.mubr.f32.mxu0 0.0
  %359 = vmatmul.mubr.f32.gmra.mrb[0].mxu0 %v138
  %v360 = vpop.f32.mrb[0].mxu0
  %v361 = vadd.f32 %v276, %v360
  %v362 = vpop.f32.mrb[0].mxu0
  %363 = vmatprep.mubr.f32.mxu0 0.0
  %364 = vmatmul.mubr.f32.gmra.mrb[0].mxu0 %v139
  %v365 = vpop.f32.mrb[0].mxu0
  %v366 = vadd.f32 %v281, %v365
  %v367 = vpop.f32.mrb[0].mxu0
  %368 = vdwg.mxu0
  %s369 = scalar_lea.vmem %s3, 256
  %v370 = vld [vmem:[%s369] sm:$0xff]
  %v371 = vld [vmem:[%s369 + $0x8] sm:$0xff]
  %v372 = vld [vmem:[%s369 + $0x10] sm:$0xff]
  %v373 = vld [vmem:[%s369 + $0x18] sm:$0xff]
  %v374 = vld [vmem:[%s369 + $0x20] sm:$0xff]
  %v375 = vld [vmem:[%s369 + $0x28] sm:$0xff]
  %v376 = vld [vmem:[%s369 + $0x30] sm:$0xff]
  %v377 = vld [vmem:[%s369 + $0x38] sm:$0xff]
  %v378 = vld [vmem:[%s369 + $0x40] sm:$0xff]
  %v379 = vld [vmem:[%s369 + $0x48] sm:$0xff]
  %v380 = vld [vmem:[%s369 + $0x50] sm:$0xff]
  %v381 = vld [vmem:[%s369 + $0x58] sm:$0xff]
  %v382 = vld [vmem:[%s369 + $0x60] sm:$0xff]
  %v383 = vld [vmem:[%s369 + $0x68] sm:$0xff]
  %v384 = vld [vmem:[%s369 + $0x70] sm:$0xff]
  %v385 = vld [vmem:[%s369 + $0x78] sm:$0xff]
  %386 = vmatprep.subr.mxu0 0.0
  %387 = vmatpush1.msra.mxu0 %v370
  %388 = vmatprep.subr.mxu0 0.0
  %389 = vmatpush1.msra.mxu0 %v371
  %390 = vmatprep.subr.mxu0 0.0
  %391 = vmatpush1.msra.mxu0 %v372
  %392 = vmatprep.subr.mxu0 0.0
  %393 = vmatpush1.msra.mxu0 %v373
  %394 = vmatprep.subr.mxu0 0.0
  %395 = vmatpush1.msra.mxu0 %v374
  %396 = vmatprep.subr.mxu0 0.0
  %397 = vmatpush1.msra.mxu0 %v375
  %398 = vmatprep.subr.mxu0 0.0
  %399 = vmatpush1.msra.mxu0 %v376
  %400 = vmatprep.subr.mxu0 0.0
  %401 = vmatpush1.msra.mxu0 %v377
  %402 = vmatprep.subr.mxu0 0.0
  %403 = vmatpush1.msra.mxu0 %v378
  %404 = vmatprep.subr.mxu0 0.0
  %405 = vmatpush1.msra.mxu0 %v379
  %406 = vmatprep.subr.mxu0 0.0
  %407 = vmatpush1.msra.mxu0 %v380
  %408 = vmatprep.subr.mxu0 0.0
  %409 = vmatpush1.msra.mxu0 %v381
  %410 = vmatprep.subr.mxu0 0.0
  %411 = vmatpush1.msra.mxu0 %v382
  %412 = vmatprep.subr.mxu0 0.0
  %413 = vmatpush1.msra.mxu0 %v383
  %414 = vmatprep.subr.mxu0 0.0
  %415 = vmatpush1.msra.mxu0 %v384
  %416 = vmatprep.subr.mxu0 0.0
  %417 = vmatpush1.msra.mxu0 %v385
  %418 = vmatprep.subr.mxu0 0.0
  %419 = vmatpush1.msra.mxu0 0.0
  %420 = vmatprep.subr.mxu0 0.0
  %421 = vmatpush1.msra.mxu0 0.0
  %422 = vmatprep.subr.mxu0 0.0
  %423 = vmatpush1.msra.mxu0 0.0
  %424 = vmatprep.subr.mxu0 0.0
  %425 = vmatpush1.msra.mxu0 0.0
  %426 = vmatprep.subr.mxu0 0.0
  %427 = vmatpush1.msra.mxu0 0.0
  %428 = vmatprep.subr.mxu0 0.0
  %429 = vmatpush1.msra.mxu0 0.0
  %430 = vmatprep.subr.mxu0 0.0
  %431 = vmatpush1.msra.mxu0 0.0
  %432 = vmatprep.subr.mxu0 0.0
  %433 = vmatpush1.msra.mxu0 0.0
  %434 = vmatprep.subr.mxu0 0.0
  %435 = vmatpush1.msra.mxu0 0.0
  %436 = vmatprep.subr.mxu0 0.0
  %437 = vmatpush1.msra.mxu0 0.0
  %438 = vmatprep.subr.mxu0 0.0
  %439 = vmatpush1.msra.mxu0 0.0
  %440 = vmatprep.subr.mxu0 0.0
  %441 = vmatpush1.msra.mxu0 0.0
  %442 = vmatprep.subr.mxu0 0.0
  %443 = vmatpush1.msra.mxu0 0.0
  %444 = vmatprep.subr.mxu0 0.0
  %445 = vmatpush1.msra.mxu0 0.0
  %446 = vmatprep.subr.mxu0 0.0
  %447 = vmatpush1.msra.mxu0 0.0
  %448 = vmatprep.subr.mxu0 0.0
  %449 = vmatpush1.msra.mxu0 0.0
  %450 = vmatprep.mubr.f32.mxu0 0.0
  %451 = vmatmul.mubr.f32.gmra.mrb[0].mxu0 %v162
  %v452 = vpop.f32.mrb[0].mxu0
  %v453 = vadd.f32 0.0, %v452
  %v454 = vpop.f32.mrb[0].mxu0
  %455 = vmatprep.mubr.f32.mxu0 0.0
  %456 = vmatmul.mubr.f32.gmra.mrb[0].mxu0 %v163
  %v457 = vpop.f32.mrb[0].mxu0
  %v458 = vadd.f32 0.0, %v457
  %v459 = vpop.f32.mrb[0].mxu0
  %460 = vmatprep.mubr.f32.mxu0 0.0
  %461 = vmatmul.mubr.f32.gmra.mrb[0].mxu0 %v164
  %v462 = vpop.f32.mrb[0].mxu0
  %v463 = vadd.f32 0.0, %v462
  %v464 = vpop.f32.mrb[0].mxu0
  %465 = vmatprep.mubr.f32.mxu0 0.0
  %466 = vmatmul.mubr.f32.gmra.mrb[0].mxu0 %v165
  %v467 = vpop.f32.mrb[0].mxu0
  %v468 = vadd.f32 0.0, %v467
  %v469 = vpop.f32.mrb[0].mxu0
  %470 = vdwg.mxu0
  %v471 = vadd.f32 %v351, %v453
  %v472 = vadd.f32 %v356, %v458
  %v473 = vadd.f32 %v361, %v463
  %v474 = vadd.f32 %v366, %v468
  %475 = vst [vmem:[%s4] sm:$0xff] %v471
  %476 = vst [vmem:[%s4 + $0x8] sm:$0xff] %v472
  %477 = vst [vmem:[%s4 + $0x10] sm:$0xff] %v473
  %478 = vst [vmem:[%s4 + $0x18] sm:$0xff] %v474
  %v479 = vadd.f32 %v471, %v472
  %v480 = vadd.f32 %v479, %v473
  %v481 = vadd.f32 %v480, %v474
  %v482 = vrot.slane %v481, 4
  %v483 = vadd.f32 %v481, %v482
  %v484 = vrot.slane %v483, 2
  %v485 = vadd.f32 %v483, %v484
  %v486 = vrot.slane %v485, 1
  %v487 = vadd.f32 %v485, %v486
  %488 = vst [vmem:[%s5] sm:$0x1] %v487
  %v489 = vmul.f32 %v471, %v471
  %v490 = vmul.f32 %v472, %v472
  %v491 = vmul.f32 %v473, %v473
  %v492 = vmul.f32 %v474, %v474
  %v493 = vadd.f32 %v489, %v490
  %v494 = vadd.f32 %v493, %v491
  %v495 = vadd.f32 %v494, %v492
  %v496 = vrot.slane %v495, 4
  %v497 = vadd.f32 %v495, %v496
  %v498 = vrot.slane %v497, 2
  %v499 = vadd.f32 %v497, %v498
  %v500 = vrot.slane %v499, 1
  %v501 = vadd.f32 %v499, %v500
  %502 = vst [vmem:[%s5 + $0x1] sm:$0x1] %v501
  // Predicated region
  $region18: #{unet_basic_up_block.5} parent=0 // pred_check
    _
  $region19: #{unet_basic_up_block.5} parent=0 // pred_check_branch
    %504 = sbr.rel (0) target = $region21
  $region20: #{unet_basic_up_block.5} parent=0 // pred_region
    _
  $region21: #{unet_basic_up_block.5} parent=0 // pred_fallthru
    _
  // Predicated region
  $region22: #{unet_basic_up_block.5} parent=0 // pred_check
    _
  $region23: #{unet_basic_up_block.5} parent=0 // pred_check_branch
    %506 = sbr.rel (0) target = $region25
  $region24: #{unet_basic_up_block.5} parent=0 // pred_region
    _
  $region25: #{unet_basic_up_block.5} parent=0 // pred_fallthru
    _
  // Predicated region
  $region26: #{unet_basic_up_block.5} parent=0 // pred_check
    _
  $region27: #{unet_basic_up_block.5} parent=0 // pred_check_branch
    %508 = sbr.rel (0) target = $region29
  $region28: #{unet_basic_up_block.5} parent=0 // pred_region
    _
  $region29: #{unet_basic_up_block.5} parent=0 // pred_fallthru
    _
  // Predicated region
  $region30: #{unet_basic_up_block.5} parent=0 // pred_check
    _
  $region31: #{unet_basic_up_block.5} parent=0 // pred_check_branch
    %510 = sbr.rel (0) target = $region33
  $region32: #{unet_basic_up_block.5} parent=0 // pred_region
    _
  $region33: #{unet_basic_up_block.5} parent=0 // pred_fallthru
    _

// kernel: unet_basic_up_block.4
$region0: #{unet_basic_up_block.4}
  #allocation0 [shape = 'u32[]', space=smem, size = 0x4, offset = 0x4, fixed_abs, tag = 'smem constant byte address 0x4 - core index']
  #allocation1 [shape = 'u32[144,128]{1,0:T(1,128)}', space=vmem, size = 0x12000, scoped, tag = 'internal scratch']
  %s0 = inlined_call_operand.vmem [shape: f32[32,128], index: 0, kind: input, shape index: {}]
  %s1 = inlined_call_operand.vmem [shape: f32[1,128], index: 1, kind: input, shape index: {}]
  %s2 = inlined_call_operand.vmem [shape: f32[1,128], index: 2, kind: input, shape index: {}]
  %s3 = inlined_call_operand.vmem [shape: f32[32,128], index: 3, kind: input, shape index: {}]
  %s4 = inlined_call_operand.vmem [shape: f32[3,256,128], index: 4, kind: input, shape index: {}]
  %s5 = inlined_call_operand.vmem [shape: f32[32,128], index: 5, kind: output, shape index: {0}]
  %s6 = inlined_call_operand.vmem [shape: f32[1,2,128], index: 6, kind: output, shape index: {1}]
  %7 = xla_tuple %s5, %s6
  %s8 = sld [smem:[#allocation0]]
  $region38: #{unet_basic_up_block.4} parent=0
    _
  %s10 = ssub.s32 1, %s8
  %s11 = scalar_select 0, %s10, %s8
  // Predicated region
  $region2: #{unet_basic_up_block.4} parent=0 // pred_check
    _
  $region3: #{unet_basic_up_block.4} parent=0 // pred_check_branch
    %13 = sbr.rel (0) target = $region5
  $region4: #{unet_basic_up_block.4} parent=0 // pred_region
    _
  $region5: #{unet_basic_up_block.4} parent=0 // pred_fallthru
    _
  // Predicated region
  $region6: #{unet_basic_up_block.4} parent=0 // pred_check
    _
  $region7: #{unet_basic_up_block.4} parent=0 // pred_check_branch
    %15 = sbr.rel (0) target = $region9
  $region8: #{unet_basic_up_block.4} parent=0 // pred_region
    _
  $region9: #{unet_basic_up_block.4} parent=0 // pred_fallthru
    _
  // Predicated region
  $region10: #{unet_basic_up_block.4} parent=0 // pred_check
    _
  $region11: #{unet_basic_up_block.4} parent=0 // pred_check_branch
    %17 = sbr.rel (0) target = $region13
  $region12: #{unet_basic_up_block.4} parent=0 // pred_region
    _
  $region13: #{unet_basic_up_block.4} parent=0 // pred_fallthru
    _
  // Predicated region
  $region14: #{unet_basic_up_block.4} parent=0 // pred_check
    _
  $region15: #{unet_basic_up_block.4} parent=0 // pred_check_branch
    %19 = sbr.rel (0) target = $region17
  $region16: #{unet_basic_up_block.4} parent=0 // pred_region
    _
  $region17: #{unet_basic_up_block.4} parent=0 // pred_fallthru
    _
  // Predicated region
  $region18: #{unet_basic_up_block.4} parent=0 // pred_check
    _
  $region19: #{unet_basic_up_block.4} parent=0 // pred_check_branch
    %21 = sbr.rel (0) target = $region21
  $region20: #{unet_basic_up_block.4} parent=0 // pred_region
    _
  $region21: #{unet_basic_up_block.4} parent=0 // pred_fallthru
    _
  %v22 = vld [vmem:[%s0] sm:$0xff]
  %v23 = vld [vmem:[%s0 + $0x8] sm:$0xff]
  %v24 = vld [vmem:[%s0 + $0x10] sm:$0xff]
  %v25 = vld [vmem:[%s0 + $0x18] sm:$0xff]
  %v26 = vld [vmem:[%s1] sm:$0x1]
  %v28 = vlaneseq
  %v29 = vshrl.u32 %v28, 7
  %v30 = vsub.s32 0, %v29
  %v31 = vrot.slane %v26, %v30
  %v33 = vmul.f32 %v22, %v31
  %v34 = vmul.f32 %v23, %v31
  %v35 = vmul.f32 %v24, %v31
  %v36 = vmul.f32 %v25, %v31
  %v37 = vld [vmem:[%s2] sm:$0x1]
  %v39 = vlaneseq
  %v40 = vshrl.u32 %v39, 7
  %v41 = vsub.s32 0, %v40
  %v42 = vrot.slane %v37, %v41
  %v44 = vadd.f32 %v33, %v42
  %v45 = vadd.f32 %v34, %v42
  %v46 = vadd.f32 %v35, %v42
  %v47 = vadd.f32 %v36, %v42
  %v48 = vmax.f32 %v44, 0.0
  %v49 = vmax.f32 %v45, 0.0
  %v50 = vmax.f32 %v46, 0.0
  %v51 = vmax.f32 %v47, 0.0
  %v52 = vld [vmem:[%s3] sm:$0xff]
  %v53 = vld [vmem:[%s3 + $0x8] sm:$0xff]
  %v54 = vld [vmem:[%s3 + $0x10] sm:$0xff]
  %v55 = vld [vmem:[%s3 + $0x18] sm:$0xff]
  %v56 = vlaneseq
  %v57 = vshrl.u32 %v56, 7
  %v58 = vadd.s32 %v57, 8
  %v59 = vadd.s32 %v57, 16
  %v60 = vadd.s32 %v57, 24
  %vm61 = vcmp.lt.s32.totalorder %v57, 0
  %v62 = vsub.s32 0, %v57
  %v63 = vsel %vm61, %v62, %v57
  %v64 = vshrl.u32 %v63, 4
  %v65 = vand.u32 %v63, 15
  %v66 = vsub.s32 0, %v65
  %v67 = vsel %vm61, %v66, %v65
  %vm68 = vcmp.lt.s32.totalorder %v58, 0
  %v69 = vsub.s32 0, %v58
  %v70 = vsel %vm68, %v69, %v58
  %v71 = vshrl.u32 %v70, 4
  %v72 = vand.u32 %v70, 15
  %v73 = vsub.s32 0, %v72
  %v74 = vsel %vm68, %v73, %v72
  %vm75 = vcmp.lt.s32.totalorder %v59, 0
  %v76 = vsub.s32 0, %v59
  %v77 = vsel %vm75, %v76, %v59
  %v78 = vshrl.u32 %v77, 4
  %v79 = vand.u32 %v77, 15
  %v80 = vsub.s32 0, %v79
  %v81 = vsel %vm75, %v80, %v79
  %vm82 = vcmp.lt.s32.totalorder %v60, 0
  %v83 = vsub.s32 0, %v60
  %v84 = vsel %vm82, %v83, %v60
  %v85 = vshrl.u32 %v84, 4
  %v86 = vand.u32 %v84, 15
  %v87 = vsub.s32 0, %v86
  %v88 = vsel %vm82, %v87, %v86
  %vm89 = vcmp.ne.s32.totalorder %v67, 0
  %vm90 = vcmp.ne.s32.totalorder %v74, 0
  %vm91 = vcmp.ne.s32.totalorder %v81, 0
  %vm92 = vcmp.ne.s32.totalorder %v88, 0
  %vm93 = vcmp.lt.s32.totalorder %v67, 0
  %vm94 = vcmp.lt.s32.totalorder %v74, 0
  %vm95 = vcmp.lt.s32.totalorder %v81, 0
  %vm96 = vcmp.lt.s32.totalorder %v88, 0
  %vm97 = vmand %vm93, %vm89
  %vm98 = vmand %vm94, %vm90
  %vm99 = vmand %vm95, %vm91
  %vm100 = vmand %vm96, %vm92
  %v101 = vadd.s32 %v67, 16
  %v102 = vadd.s32 %v74, 16
  %v103 = vadd.s32 %v81, 16
  %v104 = vadd.s32 %v88, 16
  %v105 = vsel %vm97, %v101, %v67
  %v106 = vsel %vm98, %v102, %v74
  %v107 = vsel %vm99, %v103, %v81
  %v108 = vsel %vm100, %v104, %v88
  %vm109 = vcmp.eq.s32.totalorder %v105, 0
  %vm110 = vcmp.eq.s32.totalorder %v106, 0
  %vm111 = vcmp.eq.s32.totalorder %v107, 0
  %vm112 = vcmp.eq.s32.totalorder %v108, 0
  %vm113 = vcmp.eq.s32.totalorder %v105, 15
  %vm114 = vcmp.eq.s32.totalorder %v106, 15
  %vm115 = vcmp.eq.s32.totalorder %v107, 15
  %vm116 = vcmp.eq.s32.totalorder %v108, 15
  %v119 = vrot.slane %v51, 7
  %v120 = vrot.slane %v55, 7
  %vm129 = vcmask 1040384
  %v130 = vrot.slane %v48, 7
  %v131 = vrot.slane %v52, 7
  %v132 = vrot.slane %v49, 7
  %v133 = vsel %vm129, %v130, %v132
  %v134 = vrot.slane %v53, 7
  %v135 = vsel %vm129, %v131, %v134
  %v136 = vrot.slane %v50, 7
  %v137 = vsel %vm129, %v132, %v136
  %v138 = vrot.slane %v54, 7
  %v139 = vsel %vm129, %v134, %v138
  %v140 = vsel %vm129, %v136, %v119
  %v141 = vsel %vm129, %v138, %v120
  %v150 = vsel %vm129, %v119, %v130
  %v151 = vsel %vm129, %v120, %v131
  %v152 = vsel %vm109, 1, 0
  %v153 = vsel %vm110, 1, 0
  %v154 = vsel %vm111, 1, 0
  %v155 = vsel %vm112, 1, 0
  %vm156 = vcmp.eq.s32.totalorder %v152, 1
  %vm157 = vcmp.eq.s32.totalorder %v153, 1
  %vm158 = vcmp.eq.s32.totalorder %v154, 1
  %vm159 = vcmp.eq.s32.totalorder %v155, 1
  %v160 = vsel %vm156, 0.0, %v150
  %v161 = vsel %vm156, 0.0, %v151
  %v162 = vsel %vm157, 0.0, %v133
  %v163 = vsel %vm157, 0.0, %v135
  %v164 = vsel %vm158, 0.0, %v137
  %v165 = vsel %vm158, 0.0, %v139
  %v166 = vsel %vm159, 0.0, %v140
  %v167 = vsel %vm159, 0.0, %v141
  %vm168 = vcmask 1046528
  %v169 = vrot.slane %v48, 1
  %v170 = vrot.slane %v49, 1
  %v171 = vsel %vm168, %v169, %v170
  %v172 = vrot.slane %v52, 1
  %v173 = vrot.slane %v53, 1
  %v174 = vsel %vm168, %v172, %v173
  %v175 = vrot.slane %v50, 1
  %v176 = vsel %vm168, %v170, %v175
  %v177 = vrot.slane %v54, 1
  %v178 = vsel %vm168, %v173, %v177
  %v179 = vrot.slane %v51, 1
  %v180 = vsel %vm168, %v175, %v179
  %v181 = vrot.slane %v55, 1
  %v182 = vsel %vm168, %v177, %v181
  %v193 = vsel %vm168, %v179, %v169
  %v194 = vsel %vm168, %v181, %v172
  %v195 = vsel %vm113, 1, 0
  %v196 = vsel %vm114, 1, 0
  %v197 = vsel %vm115, 1, 0
  %v198 = vsel %vm116, 1, 0
  %vm199 = vcmp.eq.s32.totalorder %v195, 1
  %vm200 = vcmp.eq.s32.totalorder %v196, 1
  %vm201 = vcmp.eq.s32.totalorder %v197, 1
  %vm202 = vcmp.eq.s32.totalorder %v198, 1
  %v203 = vsel %vm199, 0.0, %v171
  %v204 = vsel %vm199, 0.0, %v174
  %v205 = vsel %vm200, 0.0, %v176
  %v206 = vsel %vm200, 0.0, %v178
  %v207 = vsel %vm201, 0.0, %v180
  %v208 = vsel %vm201, 0.0, %v182
  %v209 = vsel %vm202, 0.0, %v193
  %v210 = vsel %vm202, 0.0, %v194
  %v211 = vld [vmem:[%s4] sm:$0xff]
  %v212 = vld [vmem:[%s4 + $0x8] sm:$0xff]
  %v213 = vld [vmem:[%s4 + $0x10] sm:$0xff]
  %v214 = vld [vmem:[%s4 + $0x18] sm:$0xff]
  %v215 = vld [vmem:[%s4 + $0x20] sm:$0xff]
  %v216 = vld [vmem:[%s4 + $0x28] sm:$0xff]
  %v217 = vld [vmem:[%s4 + $0x30] sm:$0xff]
  %v218 = vld [vmem:[%s4 + $0x38] sm:$0xff]
  %v219 = vld [vmem:[%s4 + $0x40] sm:$0xff]
  %v220 = vld [vmem:[%s4 + $0x48] sm:$0xff]
  %v221 = vld [vmem:[%s4 + $0x50] sm:$0xff]
  %v222 = vld [vmem:[%s4 + $0x58] sm:$0xff]
  %v223 = vld [vmem:[%s4 + $0x60] sm:$0xff]
  %v224 = vld [vmem:[%s4 + $0x68] sm:$0xff]
  %v225 = vld [vmem:[%s4 + $0x70] sm:$0xff]
  %v226 = vld [vmem:[%s4 + $0x78] sm:$0xff]
  %v227 = vld [vmem:[%s4 + $0x80] sm:$0xff]
  %v228 = vld [vmem:[%s4 + $0x88] sm:$0xff]
  %v229 = vld [vmem:[%s4 + $0x90] sm:$0xff]
  %v230 = vld [vmem:[%s4 + $0x98] sm:$0xff]
  %v231 = vld [vmem:[%s4 + $0xa0] sm:$0xff]
  %v232 = vld [vmem:[%s4 + $0xa8] sm:$0xff]
  %v233 = vld [vmem:[%s4 + $0xb0] sm:$0xff]
  %v234 = vld [vmem:[%s4 + $0xb8] sm:$0xff]
  %v235 = vld [vmem:[%s4 + $0xc0] sm:$0xff]
  %v236 = vld [vmem:[%s4 + $0xc8] sm:$0xff]
  %v237 = vld [vmem:[%s4 + $0xd0] sm:$0xff]
  %v238 = vld [vmem:[%s4 + $0xd8] sm:$0xff]
  %v239 = vld [vmem:[%s4 + $0xe0] sm:$0xff]
  %v240 = vld [vmem:[%s4 + $0xe8] sm:$0xff]
  %v241 = vld [vmem:[%s4 + $0xf0] sm:$0xff]
  %v242 = vld [vmem:[%s4 + $0xf8] sm:$0xff]
  %s243 = scalar_lea.vmem %s4, 256
  %v244 = vld [vmem:[%s243] sm:$0xff]
  %v245 = vld [vmem:[%s243 + $0x8] sm:$0xff]
  %v246 = vld [vmem:[%s243 + $0x10] sm:$0xff]
  %v247 = vld [vmem:[%s243 + $0x18] sm:$0xff]
  %v248 = vld [vmem:[%s243 + $0x20] sm:$0xff]
  %v249 = vld [vmem:[%s243 + $0x28] sm:$0xff]
  %v250 = vld [vmem:[%s243 + $0x30] sm:$0xff]
  %v251 = vld [vmem:[%s243 + $0x38] sm:$0xff]
  %v252 = vld [vmem:[%s243 + $0x40] sm:$0xff]
  %v253 = vld [vmem:[%s243 + $0x48] sm:$0xff]
  %v254 = vld [vmem:[%s243 + $0x50] sm:$0xff]
  %v255 = vld [vmem:[%s243 + $0x58] sm:$0xff]
  %v256 = vld [vmem:[%s243 + $0x60] sm:$0xff]
  %v257 = vld [vmem:[%s243 + $0x68] sm:$0xff]
  %v258 = vld [vmem:[%s243 + $0x70] sm:$0xff]
  %v259 = vld [vmem:[%s243 + $0x78] sm:$0xff]
  %v260 = vld [vmem:[%s243 + $0x80] sm:$0xff]
  %v261 = vld [vmem:[%s243 + $0x88] sm:$0xff]
  %v262 = vld [vmem:[%s243 + $0x90] sm:$0xff]
  %v263 = vld [vmem:[%s243 + $0x98] sm:$0xff]
  %v264 = vld [vmem:[%s243 + $0xa0] sm:$0xff]
  %v265 = vld [vmem:[%s243 + $0xa8] sm:$0xff]
  %v266 = vld [vmem:[%s243 + $0xb0] sm:$0xff]
  %v267 = vld [vmem:[%s243 + $0xb8] sm:$0xff]
  %v268 = vld [vmem:[%s243 + $0xc0] sm:$0xff]
  %v269 = vld [vmem:[%s243 + $0xc8] sm:$0xff]
  %v270 = vld [vmem:[%s243 + $0xd0] sm:$0xff]
  %v271 = vld [vmem:[%s243 + $0xd8] sm:$0xff]
  %v272 = vld [vmem:[%s243 + $0xe0] sm:$0xff]
  %v273 = vld [vmem:[%s243 + $0xe8] sm:$0xff]
  %v274 = vld [vmem:[%s243 + $0xf0] sm:$0xff]
  %v275 = vld [vmem:[%s243 + $0xf8] sm:$0xff]
  %276 = vmatprep.subr.mxu0 0.0
  %277 = vmatpush1.msra.mxu0 %v244
  %278 = vmatprep.subr.mxu0 0.0
  %279 = vmatpush1.msra.mxu0 %v245
  %280 = vmatprep.subr.mxu0 0.0
  %281 = vmatpush1.msra.mxu0 %v246
  %282 = vmatprep.subr.mxu0 0.0
  %283 = vmatpush1.msra.mxu0 %v247
  %284 = vmatprep.subr.mxu0 0.0
  %285 = vmatpush1.msra.mxu0 %v248
  %286 = vmatprep.subr.mxu0 0.0
  %287 = vmatpush1.msra.mxu0 %v249
  %288 = vmatprep.subr.mxu0 0.0
  %289 = vmatpush1.msra.mxu0 %v250
  %290 = vmatprep.subr.mxu0 0.0
  %291 = vmatpush1.msra.mxu0 %v251
  %292 = vmatprep.subr.mxu0 0.0
  %293 = vmatpush1.msra.mxu0 %v252
  %294 = vmatprep.subr.mxu0 0.0
  %295 = vmatpush1.msra.mxu0 %v253
  %296 = vmatprep.subr.mxu0 0.0
  %297 = vmatpush1.msra.mxu0 %v254
  %298 = vmatprep.subr.mxu0 0.0
  %299 = vmatpush1.msra.mxu0 %v255
  %300 = vmatprep.subr.mxu0 0.0
  %301 = vmatpush1.msra.mxu0 %v256
  %302 = vmatprep.subr.mxu0 0.0
  %303 = vmatpush1.msra.mxu0 %v257
  %304 = vmatprep.subr.mxu0 0.0
  %305 = vmatpush1.msra.mxu0 %v258
  %306 = vmatprep.subr.mxu0 0.0
  %307 = vmatpush1.msra.mxu0 %v259
  %308 = vmatprep.subr.mxu0 0.0
  %309 = vmatpush1.msra.mxu0 %v260
  %310 = vmatprep.subr.mxu0 0.0
  %311 = vmatpush1.msra.mxu0 %v261
  %312 = vmatprep.subr.mxu0 0.0
  %313 = vmatpush1.msra.mxu0 %v262
  %314 = vmatprep.subr.mxu0 0.0
  %315 = vmatpush1.msra.mxu0 %v263
  %316 = vmatprep.subr.mxu0 0.0
  %317 = vmatpush1.msra.mxu0 %v264
  %318 = vmatprep.subr.mxu0 0.0
  %319 = vmatpush1.msra.mxu0 %v265
  %320 = vmatprep.subr.mxu0 0.0
  %321 = vmatpush1.msra.mxu0 %v266
  %322 = vmatprep.subr.mxu0 0.0
  %323 = vmatpush1.msra.mxu0 %v267
  %324 = vmatprep.subr.mxu0 0.0
  %325 = vmatpush1.msra.mxu0 %v268
  %326 = vmatprep.subr.mxu0 0.0
  %327 = vmatpush1.msra.mxu0 %v269
  %328 = vmatprep.subr.mxu0 0.0
  %329 = vmatpush1.msra.mxu0 %v270
  %330 = vmatprep.subr.mxu0 0.0
  %331 = vmatpush1.msra.mxu0 %v271
  %332 = vmatprep.subr.mxu0 0.0
  %333 = vmatpush1.msra.mxu0 %v272
  %334 = vmatprep.subr.mxu0 0.0
  %335 = vmatpush1.msra.mxu0 %v273
  %336 = vmatprep.subr.mxu0 0.0
  %337 = vmatpush1.msra.mxu0 %v274
  %338 = vmatprep.subr.mxu0 0.0
  %339 = vmatpush1.msra.mxu0 %v275
  %340 = vmatprep.mubr.f32.mxu0 %v52
  %341 = vmatmul.mubr.f32.gmra.mrb[0].mxu0 %v48
  %v342 = vpop.f32.mrb[0].mxu0
  %v343 = vadd.f32 0.0, %v342
  %v344 = vpop.f32.mrb[0].mxu0
  %345 = vmatprep.mubr.f32.mxu0 %v53
  %346 = vmatmul.mubr.f32.gmra.mrb[0].mxu0 %v49
  %v347 = vpop.f32.mrb[0].mxu0
  %v348 = vadd.f32 0.0, %v347
  %v349 = vpop.f32.mrb[0].mxu0
  %350 = vmatprep.mubr.f32.mxu0 %v54
  %351 = vmatmul.mubr.f32.gmra.mrb[0].mxu0 %v50
  %v352 = vpop.f32.mrb[0].mxu0
  %v353 = vadd.f32 0.0, %v352
  %v354 = vpop.f32.mrb[0].mxu0
  %355 = vmatprep.mubr.f32.mxu0 %v55
  %356 = vmatmul.mubr.f32.gmra.mrb[0].mxu0 %v51
  %v357 = vpop.f32.mrb[0].mxu0
  %v358 = vadd.f32 0.0, %v357
  %v359 = vpop.f32.mrb[0].mxu0
  %360 = vdwg.mxu0
  %361 = vmatprep.subr.mxu0 0.0
  %362 = vmatpush1.msra.mxu0 %v211
  %363 = vmatprep.subr.mxu0 0.0
  %364 = vmatpush1.msra.mxu0 %v212
  %365 = vmatprep.subr.mxu0 0.0
  %366 = vmatpush1.msra.mxu0 %v213
  %367 = vmatprep.subr.mxu0 0.0
  %368 = vmatpush1.msra.mxu0 %v214
  %369 = vmatprep.subr.mxu0 0.0
  %370 = vmatpush1.msra.mxu0 %v215
  %371 = vmatprep.subr.mxu0 0.0
  %372 = vmatpush1.msra.mxu0 %v216
  %373 = vmatprep.subr.mxu0 0.0
  %374 = vmatpush1.msra.mxu0 %v217
  %375 = vmatprep.subr.mxu0 0.0
  %376 = vmatpush1.msra.mxu0 %v218
  %377 = vmatprep.subr.mxu0 0.0
  %378 = vmatpush1.msra.mxu0 %v219
  %379 = vmatprep.subr.mxu0 0.0
  %380 = vmatpush1.msra.mxu0 %v220
  %381 = vmatprep.subr.mxu0 0.0
  %382 = vmatpush1.msra.mxu0 %v221
  %383 = vmatprep.subr.mxu0 0.0
  %384 = vmatpush1.msra.mxu0 %v222
  %385 = vmatprep.subr.mxu0 0.0
  %386 = vmatpush1.msra.mxu0 %v223
  %387 = vmatprep.subr.mxu0 0.0
  %388 = vmatpush1.msra.mxu0 %v224
  %389 = vmatprep.subr.mxu0 0.0
  %390 = vmatpush1.msra.mxu0 %v225
  %391 = vmatprep.subr.mxu0 0.0
  %392 = vmatpush1.msra.mxu0 %v226
  %393 = vmatprep.subr.mxu0 0.0
  %394 = vmatpush1.msra.mxu0 %v227
  %395 = vmatprep.subr.mxu0 0.0
  %396 = vmatpush1.msra.mxu0 %v228
  %397 = vmatprep.subr.mxu0 0.0
  %398 = vmatpush1.msra.mxu0 %v229
  %399 = vmatprep.subr.mxu0 0.0
  %400 = vmatpush1.msra.mxu0 %v230
  %401 = vmatprep.subr.mxu0 0.0
  %402 = vmatpush1.msra.mxu0 %v231
  %403 = vmatprep.subr.mxu0 0.0
  %404 = vmatpush1.msra.mxu0 %v232
  %405 = vmatprep.subr.mxu0 0.0
  %406 = vmatpush1.msra.mxu0 %v233
  %407 = vmatprep.subr.mxu0 0.0
  %408 = vmatpush1.msra.mxu0 %v234
  %409 = vmatprep.subr.mxu0 0.0
  %410 = vmatpush1.msra.mxu0 %v235
  %411 = vmatprep.subr.mxu0 0.0
  %412 = vmatpush1.msra.mxu0 %v236
  %413 = vmatprep.subr.mxu0 0.0
  %414 = vmatpush1.msra.mxu0 %v237
  %415 = vmatprep.subr.mxu0 0.0
  %416 = vmatpush1.msra.mxu0 %v238
  %417 = vmatprep.subr.mxu0 0.0
  %418 = vmatpush1.msra.mxu0 %v239
  %419 = vmatprep.subr.mxu0 0.0
  %420 = vmatpush1.msra.mxu0 %v240
  %421 = vmatprep.subr.mxu0 0.0
  %422 = vmatpush1.msra.mxu0 %v241
  %423 = vmatprep.subr.mxu0 0.0
  %424 = vmatpush1.msra.mxu0 %v242
  %425 = vmatprep.mubr.f32.mxu0 %v161
  %426 = vmatmul.mubr.f32.gmra.mrb[0].mxu0 %v160
  %v427 = vpop.f32.mrb[0].mxu0
  %v428 = vadd.f32 %v343, %v427
  %v429 = vpop.f32.mrb[0].mxu0
  %430 = vmatprep.mubr.f32.mxu0 %v163
  %431 = vmatmul.mubr.f32.gmra.mrb[0].mxu0 %v162
  %v432 = vpop.f32.mrb[0].mxu0
  %v433 = vadd.f32 %v348, %v432
  %v434 = vpop.f32.mrb[0].mxu0
  %435 = vmatprep.mubr.f32.mxu0 %v165
  %436 = vmatmul.mubr.f32.gmra.mrb[0].mxu0 %v164
  %v437 = vpop.f32.mrb[0].mxu0
  %v438 = vadd.f32 %v353, %v437
  %v439 = vpop.f32.mrb[0].mxu0
  %440 = vmatprep.mubr.f32.mxu0 %v167
  %441 = vmatmul.mubr.f32.gmra.mrb[0].mxu0 %v166
  %v442 = vpop.f32.mrb[0].mxu0
  %v443 = vadd.f32 %v358, %v442
  %v444 = vpop.f32.mrb[0].mxu0
  %445 = vdwg.mxu0
  %s446 = scalar_lea.vmem %s4, 512
  %v447 = vld [vmem:[%s446] sm:$0xff]
  %v448 = vld [vmem:[%s446 + $0x8] sm:$0xff]
  %v449 = vld [vmem:[%s446 + $0x10] sm:$0xff]
  %v450 = vld [vmem:[%s446 + $0x18] sm:$0xff]
  %v451 = vld [vmem:[%s446 + $0x20] sm:$0xff]
  %v452 = vld [vmem:[%s446 + $0x28] sm:$0xff]
  %v453 = vld [vmem:[%s446 + $0x30] sm:$0xff]
  %v454 = vld [vmem:[%s446 + $0x38] sm:$0xff]
  %v455 = vld [vmem:[%s446 + $0x40] sm:$0xff]
  %v456 = vld [vmem:[%s446 + $0x48] sm:$0xff]
  %v457 = vld [vmem:[%s446 + $0x50] sm:$0xff]
  %v458 = vld [vmem:[%s446 + $0x58] sm:$0xff]
  %v459 = vld [vmem:[%s446 + $0x60] sm:$0xff]
  %v460 = vld [vmem:[%s446 + $0x68] sm:$0xff]
  %v461 = vld [vmem:[%s446 + $0x70] sm:$0xff]
  %v462 = vld [vmem:[%s446 + $0x78] sm:$0xff]
  %v463 = vld [vmem:[%s446 + $0x80] sm:$0xff]
  %v464 = vld [vmem:[%s446 + $0x88] sm:$0xff]
  %v465 = vld [vmem:[%s446 + $0x90] sm:$0xff]
  %v466 = vld [vmem:[%s446 + $0x98] sm:$0xff]
  %v467 = vld [vmem:[%s446 + $0xa0] sm:$0xff]
  %v468 = vld [vmem:[%s446 + $0xa8] sm:$0xff]
  %v469 = vld [vmem:[%s446 + $0xb0] sm:$0xff]
  %v470 = vld [vmem:[%s446 + $0xb8] sm:$0xff]
  %v471 = vld [vmem:[%s446 + $0xc0] sm:$0xff]
  %v472 = vld [vmem:[%s446 + $0xc8] sm:$0xff]
  %v473 = vld [vmem:[%s446 + $0xd0] sm:$0xff]
  %v474 = vld [vmem:[%s446 + $0xd8] sm:$0xff]
  %v475 = vld [vmem:[%s446 + $0xe0] sm:$0xff]
  %v476 = vld [vmem:[%s446 + $0xe8] sm:$0xff]
  %v477 = vld [vmem:[%s446 + $0xf0] sm:$0xff]
  %v478 = vld [vmem:[%s446 + $0xf8] sm:$0xff]
  %479 = vmatprep.subr.mxu0 0.0
  %480 = vmatpush1.msra.mxu0 %v447
  %481 = vmatprep.subr.mxu0 0.0
  %482 = vmatpush1.msra.mxu0 %v448
  %483 = vmatprep.subr.mxu0 0.0
  %484 = vmatpush1.msra.mxu0 %v449
  %485 = vmatprep.subr.mxu0 0.0
  %486 = vmatpush1.msra.mxu0 %v450
  %487 = vmatprep.subr.mxu0 0.0
  %488 = vmatpush1.msra.mxu0 %v451
  %489 = vmatprep.subr.mxu0 0.0
  %490 = vmatpush1.msra.mxu0 %v452
  %491 = vmatprep.subr.mxu0 0.0
  %492 = vmatpush1.msra.mxu0 %v453
  %493 = vmatprep.subr.mxu0 0.0
  %494 = vmatpush1.msra.mxu0 %v454
  %495 = vmatprep.subr.mxu0 0.0
  %496 = vmatpush1.msra.mxu0 %v455
  %497 = vmatprep.subr.mxu0 0.0
  %498 = vmatpush1.msra.mxu0 %v456
  %499 = vmatprep.subr.mxu0 0.0
  %500 = vmatpush1.msra.mxu0 %v457
  %501 = vmatprep.subr.mxu0 0.0
  %502 = vmatpush1.msra.mxu0 %v458
  %503 = vmatprep.subr.mxu0 0.0
  %504 = vmatpush1.msra.mxu0 %v459
  %505 = vmatprep.subr.mxu0 0.0
  %506 = vmatpush1.msra.mxu0 %v460
  %507 = vmatprep.subr.mxu0 0.0
  %508 = vmatpush1.msra.mxu0 %v461
  %509 = vmatprep.subr.mxu0 0.0
  %510 = vmatpush1.msra.mxu0 %v462
  %511 = vmatprep.subr.mxu0 0.0
  %512 = vmatpush1.msra.mxu0 %v463
  %513 = vmatprep.subr.mxu0 0.0
  %514 = vmatpush1.msra.mxu0 %v464
  %515 = vmatprep.subr.mxu0 0.0
  %516 = vmatpush1.msra.mxu0 %v465
  %517 = vmatprep.subr.mxu0 0.0
  %518 = vmatpush1.msra.mxu0 %v466
  %519 = vmatprep.subr.mxu0 0.0
  %520 = vmatpush1.msra.mxu0 %v467
  %521 = vmatprep.subr.mxu0 0.0
  %522 = vmatpush1.msra.mxu0 %v468
  %523 = vmatprep.subr.mxu0 0.0
  %524 = vmatpush1.msra.mxu0 %v469
  %525 = vmatprep.subr.mxu0 0.0
  %526 = vmatpush1.msra.mxu0 %v470
  %527 = vmatprep.subr.mxu0 0.0
  %528 = vmatpush1.msra.mxu0 %v471
  %529 = vmatprep.subr.mxu0 0.0
  %530 = vmatpush1.msra.mxu0 %v472
  %531 = vmatprep.subr.mxu0 0.0
  %532 = vmatpush1.msra.mxu0 %v473
  %533 = vmatprep.subr.mxu0 0.0
  %534 = vmatpush1.msra.mxu0 %v474
  %535 = vmatprep.subr.mxu0 0.0
  %536 = vmatpush1.msra.mxu0 %v475
  %537 = vmatprep.subr.mxu0 0.0
  %538 = vmatpush1.msra.mxu0 %v476
  %539 = vmatprep.subr.mxu0 0.0
  %540 = vmatpush1.msra.mxu0 %v477
  %541 = vmatprep.subr.mxu0 0.0
  %542 = vmatpush1.msra.mxu0 %v478
  %543 = vmatprep.mubr.f32.mxu0 %v204
  %544 = vmatmul.mubr.f32.gmra.mrb[0].mxu0 %v203
  %v545 = vpop.f32.mrb[0].mxu0
  %v546 = vadd.f32 0.0, %v545
  %v547 = vpop.f32.mrb[0].mxu0
  %548 = vmatprep.mubr.f32.mxu0 %v206
  %549 = vmatmul.mubr.f32.gmra.mrb[0].mxu0 %v205
  %v550 = vpop.f32.mrb[0].mxu0
  %v551 = vadd.f32 0.0, %v550
  %v552 = vpop.f32.mrb[0].mxu0
  %553 = vmatprep.mubr.f32.mxu0 %v208
  %554 = vmatmul.mubr.f32.gmra.mrb[0].mxu0 %v207
  %v555 = vpop.f32.mrb[0].mxu0
  %v556 = vadd.f32 0.0, %v555
  %v557 = vpop.f32.mrb[0].mxu0
  %558 = vmatprep.mubr.f32.mxu0 %v210
  %559 = vmatmul.mubr.f32.gmra.mrb[0].mxu0 %v209
  %v560 = vpop.f32.mrb[0].mxu0
  %v561 = vadd.f32 0.0, %v560
  %v562 = vpop.f32.mrb[0].mxu0
  %563 = vdwg.mxu0
  %v564 = vadd.f32 %v428, %v546
  %v565 = vadd.f32 %v433, %v551
  %v566 = vadd.f32 %v438, %v556
  %v567 = vadd.f32 %v443, %v561
  %568 = vst [vmem:[%s5] sm:$0xff] %v564
  %569 = vst [vmem:[%s5 + $0x8] sm:$0xff] %v565
  %570 = vst [vmem:[%s5 + $0x10] sm:$0xff] %v566
  %571 = vst [vmem:[%s5 + $0x18] sm:$0xff] %v567
  %v572 = vadd.f32 %v564, %v565
  %v573 = vadd.f32 %v572, %v566
  %v574 = vadd.f32 %v573, %v567
  %v575 = vrot.slane %v574, 4
  %v576 = vadd.f32 %v574, %v575
  %v577 = vrot.slane %v576, 2
  %v578 = vadd.f32 %v576, %v577
  %v579 = vrot.slane %v578, 1
  %v580 = vadd.f32 %v578, %v579
  %581 = vst [vmem:[%s6] sm:$0x1] %v580
  %v582 = vmul.f32 %v564, %v564
  %v583 = vmul.f32 %v565, %v565
  %v584 = vmul.f32 %v566, %v566
  %v585 = vmul.f32 %v567, %v567
  %v586 = vadd.f32 %v582, %v583
  %v587 = vadd.f32 %v586, %v584
  %v588 = vadd.f32 %v587, %v585
  %v589 = vrot.slane %v588, 4
  %v590 = vadd.f32 %v588, %v589
  %v591 = vrot.slane %v590, 2
  %v592 = vadd.f32 %v590, %v591
  %v593 = vrot.slane %v592, 1
  %v594 = vadd.f32 %v592, %v593
  %595 = vst [vmem:[%s6 + $0x1] sm:$0x1] %v594
  // Predicated region
  $region22: #{unet_basic_up_block.4} parent=0 // pred_check
    _
  $region23: #{unet_basic_up_block.4} parent=0 // pred_check_branch
    %597 = sbr.rel (0) target = $region25
  $region24: #{unet_basic_up_block.4} parent=0 // pred_region
    _
  $region25: #{unet_basic_up_block.4} parent=0 // pred_fallthru
    _
  // Predicated region
  $region26: #{unet_basic_up_block.4} parent=0 // pred_check
    _
  $region27: #{unet_basic_up_block.4} parent=0 // pred_check_branch
    %599 = sbr.rel (0) target = $region29
  $region28: #{unet_basic_up_block.4} parent=0 // pred_region
    _
  $region29: #{unet_basic_up_block.4} parent=0 // pred_fallthru
    _
  // Predicated region
  $region30: #{unet_basic_up_block.4} parent=0 // pred_check
    _
  $region31: #{unet_basic_up_block.4} parent=0 // pred_check_branch
    %601 = sbr.rel (0) target = $region33
  $region32: #{unet_basic_up_block.4} parent=0 // pred_region
    _
  $region33: #{unet_basic_up_block.4} parent=0 // pred_fallthru
    _
  // Predicated region
  $region34: #{unet_basic_up_block.4} parent=0 // pred_check
    _
  $region35: #{unet_basic_up_block.4} parent=0 // pred_check_branch
    %603 = sbr.rel (0) target = $region37
  $region36: #{unet_basic_up_block.4} parent=0 // pred_region
    _
  $region37: #{unet_basic_up_block.4} parent=0 // pred_fallthru
    _

</llo_original>
